<compile_context>
chip_gen: v6e
topology: v6e:2x2x1
jax: 0.10.0
libtpu: 0.0.40
codegen_flags: <defaults>
</compile_context>

<pallas_src>
import jax
import jax.numpy as jnp
from jax.experimental import pallas as pl
from jax.experimental.pallas import tpu as pltpu


def _round_up(n, m):
    return ((n + m - 1) // m) * m


def _cdiv(a, b):
    return (a + b - 1) // b


def _tpu_generation():
    """Best-effort TPU generation sniff: 'v5' / 'v6' / 'v7' / None."""
    try:
        kind = jax.devices()[0].device_kind.lower()
    except Exception:
        return None
    for g in ("v7", "v6", "v5"):
        if g in kind:
            return g
    return None


# ---------------------------------------------------------------------------
# Kernel: one batch tile per grid step; weights resident in VMEM.
# ---------------------------------------------------------------------------
def regressor_kernel(x_ref, w1_ref, b1_ref, w2_ref, b2_ref, w3_ref, b3_ref,
                     o_ref):
    cd = w1_ref.dtype                      # compute dtype of hidden matmuls
    xv = x_ref[...].astype(cd)             # no-op when dtypes already match

    # featurizer: Linear -> ReLU -> Linear -> ReLU  (f32 accumulation,
    # bias + ReLU epilogues in f32; cast back to cd only to feed the MXU).
    h1 = jnp.dot(xv, w1_ref[...], preferred_element_type=jnp.float32)
    h1 = jnp.maximum(h1 + b1_ref[...], 0.0).astype(cd)

    h2 = jnp.dot(h1, w2_ref[...], preferred_element_type=jnp.float32)
    h2 = jnp.maximum(h2 + b2_ref[...], 0.0)          # keep f32 for the head

    # regressor head, Linear(H, 1):
    # w3 is packed as an f32 (8, H) slab with only row 0 real, so the matmul
    # is tile-aligned; contracting the last dims of both operands yields the
    # result with batch on the LANE axis -> lane-dense store.
    head = jnp.einsum('oh,bh->ob', w3_ref[...], h2,
                      preferred_element_type=jnp.float32)       # (8, TILE_B)
    row = head[0:1, :] + b3_ref[...]                            # (1, TILE_B)
    o_ref[...] = row[None].astype(o_ref.dtype)                  # (1, 1, TILE_B)


# ---------------------------------------------------------------------------
# Wrapper
# ---------------------------------------------------------------------------
def regressor_forward(x, packed_params, *, tile_b=None, out_dtype=jnp.float32):
    """x: (B, D_IN).  packed_params: output of pack_params.  Returns (B, 1)."""
    w1, b1, w2, b2, w3, b3 = packed_params
    B, d_in = x.shape
    hp = w1.shape[1]

    gen = _tpu_generation()
    if gen == "v7":
        cap, vmem_limit = 4096, 48 * 1024 * 1024     # 64 MiB physical VMEM
    elif gen in ("v5", "v6"):
        cap, vmem_limit = 8192, 64 * 1024 * 1024     # 128 MiB physical VMEM
    else:
        cap, vmem_limit = 2048, None                 # unknown gen: be modest

    if tile_b is None:
        tile_b = cap
    # 128-row aligned, never larger than the (128-aligned) batch itself.
    tile_b = max(128, min(tile_b, _round_up(B, 128)))
    # v7x megacore: keep >= 2 grid steps so both TensorCores get work.
    if gen == "v7" and B > 2 * 128 and _cdiv(B, tile_b) < 2:
        tile_b = _round_up(_cdiv(B, 2), 128)
    tile_b = _round_up(tile_b, 128)

    # No wrapper-side jnp.pad: ragged last block is handled by Pallas; the
    # rows it produces beyond B are discarded by the final [:B] slice.
    n_tiles = _cdiv(B, tile_b)

    flops = int(2 * B * (d_in * hp + hp * hp + hp * 8))
    bytes_accessed = int(
        x.size * x.dtype.itemsize
        + sum(int(p.size) * p.dtype.itemsize for p in packed_params)
        + B * jnp.dtype(out_dtype).itemsize)

    def full(shape):
        return pl.BlockSpec(shape, lambda i, s=shape: tuple(0 for _ in s))

    out = pl.pallas_call(
        regressor_kernel,
        out_shape=jax.ShapeDtypeStruct((n_tiles, 1, tile_b), out_dtype),
        grid_spec=pltpu.PrefetchScalarGridSpec(
            num_scalar_prefetch=0,
            grid=(n_tiles,),
            in_specs=[
                pl.BlockSpec((tile_b, d_in), lambda i: (i, 0)),  # x tile
                full(w1.shape), full(b1.shape),                  # resident
                full(w2.shape), full(b2.shape),                  # resident
                full(w3.shape), full(b3.shape),                  # resident
            ],
            out_specs=pl.BlockSpec((1, 1, tile_b), lambda i: (i, 0, 0)),
        ),
        compiler_params=pltpu.CompilerParams(
            dimension_semantics=("parallel",),
            vmem_limit_bytes=vmem_limit),
        cost_estimate=pl.CostEstimate(
            flops=flops, transcendentals=0, bytes_accessed=bytes_accessed),
    )(x, w1, b1, w2, b2, w3, b3)

    # Lane-dense (n_tiles, 1, TILE_B) slab -> logical (B, 1) view (tiny).
    return out.reshape(n_tiles * tile_b, 1)[:B]


# ---------------------------------------------------------------------------
# Parameters
# ---------------------------------------------------------------------------
def init_params(key, d_in, hidden, d_out=1):
    """Logical (unpadded) f32 parameters of the concrete Regressor."""
    assert d_out == 1, "standard Regressor head is scalar"
    ks = jax.random.split(key, 6)
    scale = 0.05
    w1 = scale * jax.random.normal(ks[0], (d_in, hidden), jnp.float32)
    b1 = scale * jax.random.normal(ks[1], (hidden,), jnp.float32)
    w2 = scale * jax.random.normal(ks[2], (hidden, hidden), jnp.float32)
    b2 = scale * jax.random.normal(ks[3], (hidden,), jnp.float32)
    w3 = scale * jax.random.normal(ks[4], (hidden, d_out), jnp.float32)
    b3 = scale * jax.random.normal(ks[5], (d_out,), jnp.float32)
    return (w1, b1, w2, b2, w3, b3)


def pack_params(params, *, hidden_pad=128, compute_dtype=None):
    """Zero-pad hidden dim to a lane-dense width and lay out the head weights
    as an f32 (8, H) slab (row 0 real).  Done once at init, not per call.
    Padding is exact: padded weight rows/cols and biases are zero.
    compute_dtype=None picks bf16 on v5e (tightest HBM, no native f32 MXU
    path) and f32 otherwise; callers should feed x in the same dtype."""
    if compute_dtype is None:
        compute_dtype = jnp.bfloat16 if _tpu_generation() == "v5" else jnp.float32
    w1, b1, w2, b2, w3, b3 = params
    d_in, h = w1.shape
    hp = max(_round_up(h, 128), hidden_pad)

    w1p = jnp.zeros((d_in, hp), compute_dtype).at[:, :h].set(
        w1.astype(compute_dtype))
    b1p = jnp.zeros((1, hp), jnp.float32).at[0, :h].set(b1)
    w2p = jnp.zeros((hp, hp), compute_dtype).at[:h, :h].set(
        w2.astype(compute_dtype))
    b2p = jnp.zeros((1, hp), jnp.float32).at[0, :h].set(b2)
    # Head weights stay f32 (tiny) so the final linear layer sees f32 h2.
    w3p = jnp.zeros((8, hp), jnp.float32).at[0, :h].set(w3[:, 0])
    b3p = b3.reshape(1, 1).astype(jnp.float32)
    return (w1p, b1p, w2p, b2p, w3p, b3p)


# ---------------------------------------------------------------------------
# Reference
# ---------------------------------------------------------------------------
def reference_forward(x, params):
    w1, b1, w2, b2, w3, b3 = params
    hi = jax.lax.Precision.HIGHEST
    h = jnp.maximum(jnp.dot(x, w1, precision=hi) + b1, 0.0)
    h = jnp.maximum(jnp.dot(h, w2, precision=hi) + b2, 0.0)
    return jnp.dot(h, w3, precision=hi) + b3


if __name__ == "__main__":
    # Small, deterministic test shapes (B intentionally not a multiple of the
    # tile so the ragged-last-block path is exercised without any jnp.pad).
    B, D_IN, HIDDEN, D_OUT = 1000, 32, 64, 1

    key = jax.random.PRNGKey(0)
    k_x, k_p = jax.random.split(key)
    x = jax.random.normal(k_x, (B, D_IN), jnp.float32)
    params = init_params(k_p, D_IN, HIDDEN, D_OUT)
    ref = reference_forward(x, params)

    packed_f32 = pack_params(params, compute_dtype=jnp.float32)

    # (1) f32 path, generation-default tile (single, possibly ragged, block).
    out = jax.block_until_ready(regressor_forward(x, packed_f32))
    assert out.shape == (B, D_OUT), out.shape
    assert jnp.allclose(out, ref, atol=1e-3, rtol=1e-3), "f32 mismatch vs ref"

    # (2) f32 path, multi-tile grid with a ragged tail block.
    out2 = jax.block_until_ready(regressor_forward(x, packed_f32, tile_b=512))
    assert out2.shape == (B, D_OUT), out2.shape
    assert jnp.allclose(out2, ref, atol=1e-3, rtol=1e-3), "tiled f32 mismatch"

    # (3) bf16 I/O path (f32 accumulation, f32 epilogues, f32 head).
    packed_bf16 = pack_params(params, compute_dtype=jnp.bfloat16)
    out_bf16 = jax.block_until_ready(
        regressor_forward(x.astype(jnp.bfloat16), packed_bf16, tile_b=512))
    assert out_bf16.shape == (B, D_OUT), out_bf16.shape
    assert jnp.allclose(out_bf16, ref, atol=1e-2, rtol=5e-2), "bf16 mismatch"

    print("KERNEL_OK")
</pallas_src>

<mosaic_0001>
module attributes {stable_mosaic.version = 11 : i64} {
  func.func @regressor_kernel(%arg0: i32, %arg1: memref<1024x32xf32, #tpu.memory_space<vmem>>, %arg2: memref<32x128xf32, #tpu.memory_space<vmem>>, %arg3: memref<1x128xf32, #tpu.memory_space<vmem>>, %arg4: memref<128x128xf32, #tpu.memory_space<vmem>>, %arg5: memref<1x128xf32, #tpu.memory_space<vmem>>, %arg6: memref<8x128xf32, #tpu.memory_space<vmem>>, %arg7: memref<1x1xf32, #tpu.memory_space<vmem>>, %arg8: memref<1x1x1024xf32, #tpu.memory_space<vmem>>) attributes {dimension_semantics = [#tpu.dimension_semantics<parallel>], iteration_bounds = array<i64: 1>, scalar_prefetch = 0 : i64, scratch_operands = 0 : i64, tpu.core_type = #tpu.core_type<tc>, window_params = [{transform_indices = @transform_0, window_bounds = array<i64: 1024, 32>}, {pipeline_mode = #tpu.pipeline_mode<synchronous>, transform_indices = @transform_1, window_bounds = array<i64: 32, 128>}, {pipeline_mode = #tpu.pipeline_mode<synchronous>, transform_indices = @transform_2, window_bounds = array<i64: 1, 128>}, {pipeline_mode = #tpu.pipeline_mode<synchronous>, transform_indices = @transform_3, window_bounds = array<i64: 128, 128>}, {pipeline_mode = #tpu.pipeline_mode<synchronous>, transform_indices = @transform_4, window_bounds = array<i64: 1, 128>}, {pipeline_mode = #tpu.pipeline_mode<synchronous>, transform_indices = @transform_5, window_bounds = array<i64: 8, 128>}, {pipeline_mode = #tpu.pipeline_mode<synchronous>, transform_indices = @transform_6, window_bounds = array<i64: 1, 1>}, {transform_indices = @transform_7, window_bounds = array<i64: 1, 1, 1024>}]} {
    %c0 = arith.constant 0 : index
    %c0_0 = arith.constant 0 : index
    %0 = vector.load %arg1[%c0, %c0_0] : memref<1024x32xf32, #tpu.memory_space<vmem>>, vector<1024x32xf32>
    %c0_1 = arith.constant 0 : index
    %c0_2 = arith.constant 0 : index
    %1 = vector.load %arg2[%c0_1, %c0_2] : memref<32x128xf32, #tpu.memory_space<vmem>>, vector<32x128xf32>
    %cst = arith.constant dense<0.000000e+00> : vector<1024x128xf32>
    %2 = tpu.matmul %0, %1, %cst {dimension_numbers = #tpu.dot_dimension_numbers<[1], [0], [0], [1], [0, 0, 1, 1], [], []>} : vector<1024x32xf32>, vector<32x128xf32>, vector<1024x128xf32> -> vector<1024x128xf32>
    %c0_3 = arith.constant 0 : index
    %c0_4 = arith.constant 0 : index
    %3 = vector.load %arg3[%c0_3, %c0_4] : memref<1x128xf32, #tpu.memory_space<vmem>>, vector<1x128xf32>
    %4 = vector.broadcast %3 : vector<1x128xf32> to vector<1024x128xf32>
    %5 = arith.addf %2, %4 : vector<1024x128xf32>
    %cst_5 = arith.constant 0.000000e+00 : f32
    %6 = vector.broadcast %cst_5 : f32 to vector<1024x128xf32>
    %7 = arith.maximumf %5, %6 : vector<1024x128xf32>
    %c0_6 = arith.constant 0 : index
    %c0_7 = arith.constant 0 : index
    %8 = vector.load %arg4[%c0_6, %c0_7] : memref<128x128xf32, #tpu.memory_space<vmem>>, vector<128x128xf32>
    %cst_8 = arith.constant dense<0.000000e+00> : vector<1024x128xf32>
    %9 = tpu.matmul %7, %8, %cst_8 {dimension_numbers = #tpu.dot_dimension_numbers<[1], [0], [0], [1], [0, 0, 1, 1], [], []>} : vector<1024x128xf32>, vector<128x128xf32>, vector<1024x128xf32> -> vector<1024x128xf32>
    %c0_9 = arith.constant 0 : index
    %c0_10 = arith.constant 0 : index
    %10 = vector.load %arg5[%c0_9, %c0_10] : memref<1x128xf32, #tpu.memory_space<vmem>>, vector<1x128xf32>
    %11 = vector.broadcast %10 : vector<1x128xf32> to vector<1024x128xf32>
    %12 = arith.addf %9, %11 : vector<1024x128xf32>
    %cst_11 = arith.constant 0.000000e+00 : f32
    %13 = vector.broadcast %cst_11 : f32 to vector<1024x128xf32>
    %14 = arith.maximumf %12, %13 : vector<1024x128xf32>
    %c0_12 = arith.constant 0 : index
    %c0_13 = arith.constant 0 : index
    %15 = vector.load %arg6[%c0_12, %c0_13] : memref<8x128xf32, #tpu.memory_space<vmem>>, vector<8x128xf32>
    "tpu.trace_start"() <{level = 10 : i32, message = "oh,bh->ob"}> : () -> ()
    %cst_14 = arith.constant dense<0.000000e+00> : vector<8x1024xf32>
    %16 = tpu.matmul %15, %14, %cst_14 {dimension_numbers = #tpu.dot_dimension_numbers<[1], [1], [0], [0], [0, 0, 1, 0], [], []>} : vector<8x128xf32>, vector<1024x128xf32>, vector<8x1024xf32> -> vector<8x1024xf32>
    "tpu.trace_stop"() : () -> ()
    %17 = vector.extract_strided_slice %16 {offsets = [0, 0], sizes = [1, 1024], strides = [1, 1]} : vector<8x1024xf32> to vector<1x1024xf32>
    %c0_15 = arith.constant 0 : index
    %c0_16 = arith.constant 0 : index
    %18 = vector.load %arg7[%c0_15, %c0_16] : memref<1x1xf32, #tpu.memory_space<vmem>>, vector<1x1xf32>
    %19 = vector.broadcast %18 : vector<1x1xf32> to vector<1x1024xf32>
    %20 = arith.addf %17, %19 : vector<1x1024xf32>
    %21 = vector.shape_cast %20 : vector<1x1024xf32> to vector<1x1x1024xf32>
    %c0_17 = arith.constant 0 : index
    %c0_18 = arith.constant 0 : index
    %c0_19 = arith.constant 0 : index
    %22 = vector.load %arg8[%c0_17, %c0_18, %c0_19] : memref<1x1x1024xf32, #tpu.memory_space<vmem>>, vector<1x1x1024xf32>
    tpu.vector_store %arg8[%c0_17, %c0_18, %c0_19], %21 {strides = array<i32>} : memref<1x1x1024xf32, #tpu.memory_space<vmem>>, vector<1x1x1024xf32>,
    return
  }
  func.func @transform_0(%arg0: i32) -> (i32, i32) {
    %c0_i32 = arith.constant 0 : i32
    %c0_i32_0 = arith.constant 0 : i32
    return %arg0, %c0_i32 : i32, i32
  }
  func.func @transform_1(%arg0: i32) -> (i32, i32) {
    %c0_i32 = arith.constant 0 : i32
    %c0_i32_0 = arith.constant 0 : i32
    %c0_i32_1 = arith.constant 0 : i32
    return %c0_i32, %c0_i32_0 : i32, i32
  }
  func.func @transform_2(%arg0: i32) -> (i32, i32) {
    %c0_i32 = arith.constant 0 : i32
    %c0_i32_0 = arith.constant 0 : i32
    %c0_i32_1 = arith.constant 0 : i32
    return %c0_i32, %c0_i32_0 : i32, i32
  }
  func.func @transform_3(%arg0: i32) -> (i32, i32) {
    %c0_i32 = arith.constant 0 : i32
    %c0_i32_0 = arith.constant 0 : i32
    %c0_i32_1 = arith.constant 0 : i32
    return %c0_i32, %c0_i32_0 : i32, i32
  }
  func.func @transform_4(%arg0: i32) -> (i32, i32) {
    %c0_i32 = arith.constant 0 : i32
    %c0_i32_0 = arith.constant 0 : i32
    %c0_i32_1 = arith.constant 0 : i32
    return %c0_i32, %c0_i32_0 : i32, i32
  }
  func.func @transform_5(%arg0: i32) -> (i32, i32) {
    %c0_i32 = arith.constant 0 : i32
    %c0_i32_0 = arith.constant 0 : i32
    %c0_i32_1 = arith.constant 0 : i32
    return %c0_i32, %c0_i32_0 : i32, i32
  }
  func.func @transform_6(%arg0: i32) -> (i32, i32) {
    %c0_i32 = arith.constant 0 : i32
    %c0_i32_0 = arith.constant 0 : i32
    %c0_i32_1 = arith.constant 0 : i32
    return %c0_i32, %c0_i32_0 : i32, i32
  }
  func.func @transform_7(%arg0: i32) -> (i32, i32, i32) {
    %c0_i32 = arith.constant 0 : i32
    %c0_i32_0 = arith.constant 0 : i32
    %c0_i32_1 = arith.constant 0 : i32
    return %arg0, %c0_i32, %c0_i32_0 : i32, i32, i32
  }
}

</mosaic_0001>

<llo_original>
// kernel: tpu_custom_call.1
$region0: #{tpu_custom_call.1}
  #allocation0 [shape = 'u32[]', space=smem, size = 0x4, offset = 0x4, fixed_abs, tag = 'smem constant byte address 0x4 - core index']
  #allocation1 [shape = 'u32[144,128]{1,0:T(1,128)}', space=vmem, size = 0x12000, scoped, tag = 'internal scratch']
  #allocation2 [shape = 'f32[1,1]{1,0:T(1,128)S(1)}', space=vmem, size = 0x200, scoped, tag = 'scoped memory for tpu_custom_call.1']
  %s0 = inlined_call_operand.vmem [shape: f32[1000,32], index: 0, kind: input, shape index: {}]
  %s1 = inlined_call_operand.vmem [shape: f32[32,128], index: 1, kind: input, shape index: {}]
  %s2 = inlined_call_operand.vmem [shape: f32[1,128], index: 2, kind: input, shape index: {}]
  %s3 = inlined_call_operand.vmem [shape: f32[128,128], index: 3, kind: input, shape index: {}]
  %s4 = inlined_call_operand.vmem [shape: f32[1,128], index: 4, kind: input, shape index: {}]
  %s5 = inlined_call_operand.vmem [shape: f32[8,128], index: 5, kind: input, shape index: {}]
  %s6 = inlined_call_operand.<no memory space> [shape: f32[1,1], index: 6, kind: input, shape index: {}]
  %s7 = inlined_call_operand.hbm [shape: f32[1,1,1024], index: 7, kind: output, shape index: {}]
  %s8 = sld [smem:[#allocation0]]
  $region38: #{tpu_custom_call.1} parent=0
    _
  %s10 = ssub.s32 1, %s8
  %s11 = scalar_select 0, %s10, %s8
  %v12 = vstv %s6
  %13 = vst [vmem:[#allocation2] sm:$0x1] %v12
  $region1: #{tpu_custom_call.1} parent=0
    #allocation3 [shape = 'u8[4096]{0}', space=vmem, size = 0x1000, scoped, tag = 'output window, operand 0, single buffered']
    #allocation4 [shape = 's32[1]{0}', space=sflag, size = 0x4, scoped, tag = 'scoped memory for tpu_custom_call.1']
    %14 = vsyncpa [#allocation4], 0
    // Predicated region
    $region2: #{tpu_custom_call.1} parent=1 // pred_check
      _
    $region3: #{tpu_custom_call.1} parent=1 // pred_check_branch
      %16 = sbr.rel (0) target = $region5
    $region4: #{tpu_custom_call.1} parent=1 // pred_region
      _
    $region5: #{tpu_custom_call.1} parent=1 // pred_fallthru
      _
    // Predicated region
    $region6: #{tpu_custom_call.1} parent=1 // pred_check
      _
    $region7: #{tpu_custom_call.1} parent=1 // pred_check_branch
      %18 = sbr.rel (0) target = $region9
    $region8: #{tpu_custom_call.1} parent=1 // pred_region
      _
    $region9: #{tpu_custom_call.1} parent=1 // pred_fallthru
      _
    // Predicated region
    $region10: #{tpu_custom_call.1} parent=1 // pred_check
      _
    $region11: #{tpu_custom_call.1} parent=1 // pred_check_branch
      %20 = sbr.rel (0) target = $region13
    $region12: #{tpu_custom_call.1} parent=1 // pred_region
      _
    $region13: #{tpu_custom_call.1} parent=1 // pred_fallthru
      _
    // Predicated region
    $region14: #{tpu_custom_call.1} parent=1 // pred_check
      _
    $region15: #{tpu_custom_call.1} parent=1 // pred_check_branch
      %22 = sbr.rel (0) target = $region17
    $region16: #{tpu_custom_call.1} parent=1 // pred_region
      _
    $region17: #{tpu_custom_call.1} parent=1 // pred_fallthru
      _
    // Predicated region
    $region18: #{tpu_custom_call.1} parent=1 // pred_check
      _
    $region19: #{tpu_custom_call.1} parent=1 // pred_check_branch
      %24 = sbr.rel (0) target = $region21
    $region20: #{tpu_custom_call.1} parent=1 // pred_region
      _
    $region21: #{tpu_custom_call.1} parent=1 // pred_fallthru
      _
    // Predicated region
    $region22: #{tpu_custom_call.1} parent=1 // pred_check
      _
    $region23: #{tpu_custom_call.1} parent=1 // pred_check_branch
      %26 = sbr.rel (0) target = $region25
    $region24: #{tpu_custom_call.1} parent=1 // pred_region
      _
    $region25: #{tpu_custom_call.1} parent=1 // pred_fallthru
      _
    // Predicated region
    $region26: #{tpu_custom_call.1} parent=1 // pred_check
      _
    $region27: #{tpu_custom_call.1} parent=1 // pred_check_branch
      %28 = sbr.rel (0) target = $region29
    $region28: #{tpu_custom_call.1} parent=1 // pred_region
      _
    $region29: #{tpu_custom_call.1} parent=1 // pred_fallthru
      _
    %v29 = vld [vmem:[%s0] sm:$0xff]
    %v30 = vld [vmem:[%s0 + $0x8] sm:$0xff]
    %v31 = vld [vmem:[%s0 + $0x10] sm:$0xff]
    %v32 = vld [vmem:[%s0 + $0x18] sm:$0xff]
    %v33 = vld [vmem:[%s0 + $0x20] sm:$0xff]
    %v34 = vld [vmem:[%s0 + $0x28] sm:$0xff]
    %v35 = vld [vmem:[%s0 + $0x30] sm:$0xff]
    %v36 = vld [vmem:[%s0 + $0x38] sm:$0xff]
    %v37 = vld [vmem:[%s0 + $0x40] sm:$0xff]
    %v38 = vld [vmem:[%s0 + $0x48] sm:$0xff]
    %v39 = vld [vmem:[%s0 + $0x50] sm:$0xff]
    %v40 = vld [vmem:[%s0 + $0x58] sm:$0xff]
    %v41 = vld [vmem:[%s0 + $0x60] sm:$0xff]
    %v42 = vld [vmem:[%s0 + $0x68] sm:$0xff]
    %v43 = vld [vmem:[%s0 + $0x70] sm:$0xff]
    %v44 = vld [vmem:[%s0 + $0x78] sm:$0xff]
    %v45 = vld [vmem:[%s0 + $0x80] sm:$0xff]
    %v46 = vld [vmem:[%s0 + $0x88] sm:$0xff]
    %v47 = vld [vmem:[%s0 + $0x90] sm:$0xff]
    %v48 = vld [vmem:[%s0 + $0x98] sm:$0xff]
    %v49 = vld [vmem:[%s0 + $0xa0] sm:$0xff]
    %v50 = vld [vmem:[%s0 + $0xa8] sm:$0xff]
    %v51 = vld [vmem:[%s0 + $0xb0] sm:$0xff]
    %v52 = vld [vmem:[%s0 + $0xb8] sm:$0xff]
    %v53 = vld [vmem:[%s0 + $0xc0] sm:$0xff]
    %v54 = vld [vmem:[%s0 + $0xc8] sm:$0xff]
    %v55 = vld [vmem:[%s0 + $0xd0] sm:$0xff]
    %v56 = vld [vmem:[%s0 + $0xd8] sm:$0xff]
    %v57 = vld [vmem:[%s0 + $0xe0] sm:$0xff]
    %v58 = vld [vmem:[%s0 + $0xe8] sm:$0xff]
    %v59 = vld [vmem:[%s0 + $0xf0] sm:$0xff]
    %v60 = vld [vmem:[%s0 + $0xf8] sm:$0xff]
    %v61 = vld [vmem:[%s0 + $0x100] sm:$0xff]
    %v62 = vld [vmem:[%s0 + $0x108] sm:$0xff]
    %v63 = vld [vmem:[%s0 + $0x110] sm:$0xff]
    %v64 = vld [vmem:[%s0 + $0x118] sm:$0xff]
    %v65 = vld [vmem:[%s0 + $0x120] sm:$0xff]
    %v66 = vld [vmem:[%s0 + $0x128] sm:$0xff]
    %v67 = vld [vmem:[%s0 + $0x130] sm:$0xff]
    %v68 = vld [vmem:[%s0 + $0x138] sm:$0xff]
    %v69 = vld [vmem:[%s0 + $0x140] sm:$0xff]
    %v70 = vld [vmem:[%s0 + $0x148] sm:$0xff]
    %v71 = vld [vmem:[%s0 + $0x150] sm:$0xff]
    %v72 = vld [vmem:[%s0 + $0x158] sm:$0xff]
    %v73 = vld [vmem:[%s0 + $0x160] sm:$0xff]
    %v74 = vld [vmem:[%s0 + $0x168] sm:$0xff]
    %v75 = vld [vmem:[%s0 + $0x170] sm:$0xff]
    %v76 = vld [vmem:[%s0 + $0x178] sm:$0xff]
    %v77 = vld [vmem:[%s0 + $0x180] sm:$0xff]
    %v78 = vld [vmem:[%s0 + $0x188] sm:$0xff]
    %v79 = vld [vmem:[%s0 + $0x190] sm:$0xff]
    %v80 = vld [vmem:[%s0 + $0x198] sm:$0xff]
    %v81 = vld [vmem:[%s0 + $0x1a0] sm:$0xff]
    %v82 = vld [vmem:[%s0 + $0x1a8] sm:$0xff]
    %v83 = vld [vmem:[%s0 + $0x1b0] sm:$0xff]
    %v84 = vld [vmem:[%s0 + $0x1b8] sm:$0xff]
    %v85 = vld [vmem:[%s0 + $0x1c0] sm:$0xff]
    %v86 = vld [vmem:[%s0 + $0x1c8] sm:$0xff]
    %v87 = vld [vmem:[%s0 + $0x1d0] sm:$0xff]
    %v88 = vld [vmem:[%s0 + $0x1d8] sm:$0xff]
    %v89 = vld [vmem:[%s0 + $0x1e0] sm:$0xff]
    %v90 = vld [vmem:[%s0 + $0x1e8] sm:$0xff]
    %v91 = vld [vmem:[%s0 + $0x1f0] sm:$0xff]
    %v92 = vld [vmem:[%s0 + $0x1f8] sm:$0xff]
    %v93 = vld [vmem:[%s0 + $0x200] sm:$0xff]
    %v94 = vld [vmem:[%s0 + $0x208] sm:$0xff]
    %v95 = vld [vmem:[%s0 + $0x210] sm:$0xff]
    %v96 = vld [vmem:[%s0 + $0x218] sm:$0xff]
    %v97 = vld [vmem:[%s0 + $0x220] sm:$0xff]
    %v98 = vld [vmem:[%s0 + $0x228] sm:$0xff]
    %v99 = vld [vmem:[%s0 + $0x230] sm:$0xff]
    %v100 = vld [vmem:[%s0 + $0x238] sm:$0xff]
    %v101 = vld [vmem:[%s0 + $0x240] sm:$0xff]
    %v102 = vld [vmem:[%s0 + $0x248] sm:$0xff]
    %v103 = vld [vmem:[%s0 + $0x250] sm:$0xff]
    %v104 = vld [vmem:[%s0 + $0x258] sm:$0xff]
    %v105 = vld [vmem:[%s0 + $0x260] sm:$0xff]
    %v106 = vld [vmem:[%s0 + $0x268] sm:$0xff]
    %v107 = vld [vmem:[%s0 + $0x270] sm:$0xff]
    %v108 = vld [vmem:[%s0 + $0x278] sm:$0xff]
    %v109 = vld [vmem:[%s0 + $0x280] sm:$0xff]
    %v110 = vld [vmem:[%s0 + $0x288] sm:$0xff]
    %v111 = vld [vmem:[%s0 + $0x290] sm:$0xff]
    %v112 = vld [vmem:[%s0 + $0x298] sm:$0xff]
    %v113 = vld [vmem:[%s0 + $0x2a0] sm:$0xff]
    %v114 = vld [vmem:[%s0 + $0x2a8] sm:$0xff]
    %v115 = vld [vmem:[%s0 + $0x2b0] sm:$0xff]
    %v116 = vld [vmem:[%s0 + $0x2b8] sm:$0xff]
    %v117 = vld [vmem:[%s0 + $0x2c0] sm:$0xff]
    %v118 = vld [vmem:[%s0 + $0x2c8] sm:$0xff]
    %v119 = vld [vmem:[%s0 + $0x2d0] sm:$0xff]
    %v120 = vld [vmem:[%s0 + $0x2d8] sm:$0xff]
    %v121 = vld [vmem:[%s0 + $0x2e0] sm:$0xff]
    %v122 = vld [vmem:[%s0 + $0x2e8] sm:$0xff]
    %v123 = vld [vmem:[%s0 + $0x2f0] sm:$0xff]
    %v124 = vld [vmem:[%s0 + $0x2f8] sm:$0xff]
    %v125 = vld [vmem:[%s0 + $0x300] sm:$0xff]
    %v126 = vld [vmem:[%s0 + $0x308] sm:$0xff]
    %v127 = vld [vmem:[%s0 + $0x310] sm:$0xff]
    %v128 = vld [vmem:[%s0 + $0x318] sm:$0xff]
    %v129 = vld [vmem:[%s0 + $0x320] sm:$0xff]
    %v130 = vld [vmem:[%s0 + $0x328] sm:$0xff]
    %v131 = vld [vmem:[%s0 + $0x330] sm:$0xff]
    %v132 = vld [vmem:[%s0 + $0x338] sm:$0xff]
    %v133 = vld [vmem:[%s0 + $0x340] sm:$0xff]
    %v134 = vld [vmem:[%s0 + $0x348] sm:$0xff]
    %v135 = vld [vmem:[%s0 + $0x350] sm:$0xff]
    %v136 = vld [vmem:[%s0 + $0x358] sm:$0xff]
    %v137 = vld [vmem:[%s0 + $0x360] sm:$0xff]
    %v138 = vld [vmem:[%s0 + $0x368] sm:$0xff]
    %v139 = vld [vmem:[%s0 + $0x370] sm:$0xff]
    %v140 = vld [vmem:[%s0 + $0x378] sm:$0xff]
    %v141 = vld [vmem:[%s0 + $0x380] sm:$0xff]
    %v142 = vld [vmem:[%s0 + $0x388] sm:$0xff]
    %v143 = vld [vmem:[%s0 + $0x390] sm:$0xff]
    %v144 = vld [vmem:[%s0 + $0x398] sm:$0xff]
    %v145 = vld [vmem:[%s0 + $0x3a0] sm:$0xff]
    %v146 = vld [vmem:[%s0 + $0x3a8] sm:$0xff]
    %v147 = vld [vmem:[%s0 + $0x3b0] sm:$0xff]
    %v148 = vld [vmem:[%s0 + $0x3b8] sm:$0xff]
    %v149 = vld [vmem:[%s0 + $0x3c0] sm:$0xff]
    %v150 = vld [vmem:[%s0 + $0x3c8] sm:$0xff]
    %v151 = vld [vmem:[%s0 + $0x3d0] sm:$0xff]
    %v152 = vld [vmem:[%s0 + $0x3d8] sm:$0xff]
    %v153 = vld [vmem:[%s0 + $0x3e0] sm:$0xff]
    %v154 = vld [vmem:[%s0 + $0x3e8] sm:$0xff]
    %v155 = vld [vmem:[%s0 + $0x3f0] sm:$0xff]
    %v156 = vld [vmem:[%s0 + $0x3f8] sm:$0xff]
    %v157 = vld [vmem:[%s1] sm:$0xff]
    %v158 = vld [vmem:[%s1 + $0x8] sm:$0xff]
    %v159 = vld [vmem:[%s1 + $0x10] sm:$0xff]
    %v160 = vld [vmem:[%s1 + $0x18] sm:$0xff]
    %v161 = vld [vmem:[%s2] sm:$0x1]
    %v163 = vlaneseq
    %v164 = vshrl.u32 %v163, 7
    %v165 = vsub.s32 0, %v164
    %v166 = vrot.slane %v161, %v165
    %vm168 = vcmask 261120
    %v170 = vsel %vm168, %v29, 0
    %v173 = vsel %vm168, %v30, 0
    %v176 = vsel %vm168, %v31, 0
    %v179 = vsel %vm168, %v32, 0
    %v182 = vsel %vm168, %v33, 0
    %v185 = vsel %vm168, %v34, 0
    %v188 = vsel %vm168, %v35, 0
    %v191 = vsel %vm168, %v36, 0
    %v194 = vsel %vm168, %v37, 0
    %v197 = vsel %vm168, %v38, 0
    %v200 = vsel %vm168, %v39, 0
    %v203 = vsel %vm168, %v40, 0
    %v206 = vsel %vm168, %v41, 0
    %v209 = vsel %vm168, %v42, 0
    %v212 = vsel %vm168, %v43, 0
    %v215 = vsel %vm168, %v44, 0
    %v218 = vsel %vm168, %v45, 0
    %v221 = vsel %vm168, %v46, 0
    %v224 = vsel %vm168, %v47, 0
    %v227 = vsel %vm168, %v48, 0
    %v230 = vsel %vm168, %v49, 0
    %v233 = vsel %vm168, %v50, 0
    %v236 = vsel %vm168, %v51, 0
    %v239 = vsel %vm168, %v52, 0
    %v242 = vsel %vm168, %v53, 0
    %v245 = vsel %vm168, %v54, 0
    %v248 = vsel %vm168, %v55, 0
    %v251 = vsel %vm168, %v56, 0
    %v254 = vsel %vm168, %v57, 0
    %v257 = vsel %vm168, %v58, 0
    %v260 = vsel %vm168, %v59, 0
    %v263 = vsel %vm168, %v60, 0
    %v266 = vsel %vm168, %v61, 0
    %v269 = vsel %vm168, %v62, 0
    %v272 = vsel %vm168, %v63, 0
    %v275 = vsel %vm168, %v64, 0
    %v278 = vsel %vm168, %v65, 0
    %v281 = vsel %vm168, %v66, 0
    %v284 = vsel %vm168, %v67, 0
    %v287 = vsel %vm168, %v68, 0
    %v290 = vsel %vm168, %v69, 0
    %v293 = vsel %vm168, %v70, 0
    %v296 = vsel %vm168, %v71, 0
    %v299 = vsel %vm168, %v72, 0
    %v302 = vsel %vm168, %v73, 0
    %v305 = vsel %vm168, %v74, 0
    %v308 = vsel %vm168, %v75, 0
    %v311 = vsel %vm168, %v76, 0
    %v314 = vsel %vm168, %v77, 0
    %v317 = vsel %vm168, %v78, 0
    %v320 = vsel %vm168, %v79, 0
    %v323 = vsel %vm168, %v80, 0
    %v326 = vsel %vm168, %v81, 0
    %v329 = vsel %vm168, %v82, 0
    %v332 = vsel %vm168, %v83, 0
    %v335 = vsel %vm168, %v84, 0
    %v338 = vsel %vm168, %v85, 0
    %v341 = vsel %vm168, %v86, 0
    %v344 = vsel %vm168, %v87, 0
    %v347 = vsel %vm168, %v88, 0
    %v350 = vsel %vm168, %v89, 0
    %v353 = vsel %vm168, %v90, 0
    %v356 = vsel %vm168, %v91, 0
    %v359 = vsel %vm168, %v92, 0
    %v362 = vsel %vm168, %v93, 0
    %v365 = vsel %vm168, %v94, 0
    %v368 = vsel %vm168, %v95, 0
    %v371 = vsel %vm168, %v96, 0
    %v374 = vsel %vm168, %v97, 0
    %v377 = vsel %vm168, %v98, 0
    %v380 = vsel %vm168, %v99, 0
    %v383 = vsel %vm168, %v100, 0
    %v386 = vsel %vm168, %v101, 0
    %v389 = vsel %vm168, %v102, 0
    %v392 = vsel %vm168, %v103, 0
    %v395 = vsel %vm168, %v104, 0
    %v398 = vsel %vm168, %v105, 0
    %v401 = vsel %vm168, %v106, 0
    %v404 = vsel %vm168, %v107, 0
    %v407 = vsel %vm168, %v108, 0
    %v410 = vsel %vm168, %v109, 0
    %v413 = vsel %vm168, %v110, 0
    %v416 = vsel %vm168, %v111, 0
    %v419 = vsel %vm168, %v112, 0
    %v422 = vsel %vm168, %v113, 0
    %v425 = vsel %vm168, %v114, 0
    %v428 = vsel %vm168, %v115, 0
    %v431 = vsel %vm168, %v116, 0
    %v434 = vsel %vm168, %v117, 0
    %v437 = vsel %vm168, %v118, 0
    %v440 = vsel %vm168, %v119, 0
    %v443 = vsel %vm168, %v120, 0
    %v446 = vsel %vm168, %v121, 0
    %v449 = vsel %vm168, %v122, 0
    %v452 = vsel %vm168, %v123, 0
    %v455 = vsel %vm168, %v124, 0
    %v458 = vsel %vm168, %v125, 0
    %v461 = vsel %vm168, %v126, 0
    %v464 = vsel %vm168, %v127, 0
    %v467 = vsel %vm168, %v128, 0
    %v470 = vsel %vm168, %v129, 0
    %v473 = vsel %vm168, %v130, 0
    %v476 = vsel %vm168, %v131, 0
    %v479 = vsel %vm168, %v132, 0
    %v482 = vsel %vm168, %v133, 0
    %v485 = vsel %vm168, %v134, 0
    %v488 = vsel %vm168, %v135, 0
    %v491 = vsel %vm168, %v136, 0
    %v494 = vsel %vm168, %v137, 0
    %v497 = vsel %vm168, %v138, 0
    %v500 = vsel %vm168, %v139, 0
    %v503 = vsel %vm168, %v140, 0
    %v506 = vsel %vm168, %v141, 0
    %v509 = vsel %vm168, %v142, 0
    %v512 = vsel %vm168, %v143, 0
    %v515 = vsel %vm168, %v144, 0
    %v518 = vsel %vm168, %v145, 0
    %v521 = vsel %vm168, %v146, 0
    %v524 = vsel %vm168, %v147, 0
    %v527 = vsel %vm168, %v148, 0
    %v530 = vsel %vm168, %v149, 0
    %v533 = vsel %vm168, %v150, 0
    %v536 = vsel %vm168, %v151, 0
    %v539 = vsel %vm168, %v152, 0
    %v542 = vsel %vm168, %v153, 0
    %v545 = vsel %vm168, %v154, 0
    %v548 = vsel %vm168, %v155, 0
    %v551 = vsel %vm168, %v156, 0
    %553 = vmatprep.subr.mxu0 0.0
    %554 = vmatpush1.msra.mxu0 0.0
    %555 = vmatprep.subr.mxu0 0.0
    %556 = vmatpush1.msra.mxu0 0.0
    %557 = vmatprep.subr.mxu0 0.0
    %558 = vmatpush1.msra.mxu0 0.0
    %559 = vmatprep.subr.mxu0 0.0
    %560 = vmatpush1.msra.mxu0 0.0
    %561 = vmatprep.subr.mxu0 0.0
    %562 = vmatpush1.msra.mxu0 0.0
    %563 = vmatprep.subr.mxu0 0.0
    %564 = vmatpush1.msra.mxu0 0.0
    %565 = vmatprep.subr.mxu0 0.0
    %566 = vmatpush1.msra.mxu0 0.0
    %567 = vmatprep.subr.mxu0 0.0
    %568 = vmatpush1.msra.mxu0 0.0
    %569 = vmatprep.subr.mxu0 0.0
    %570 = vmatpush1.msra.mxu0 0.0
    %571 = vmatprep.subr.mxu0 0.0
    %572 = vmatpush1.msra.mxu0 0.0
    %573 = vmatprep.subr.mxu0 0.0
    %574 = vmatpush1.msra.mxu0 0.0
    %575 = vmatprep.subr.mxu0 0.0
    %576 = vmatpush1.msra.mxu0 0.0
    %577 = vmatprep.subr.mxu0 0.0
    %578 = vmatpush1.msra.mxu0 %v160
    %579 = vmatprep.subr.mxu0 0.0
    %580 = vmatpush1.msra.mxu0 %v159
    %581 = vmatprep.subr.mxu0 0.0
    %582 = vmatpush1.msra.mxu0 %v158
    %583 = vmatprep.subr.mxu0 0.0
    %584 = vmatpush1.msra.mxu0 %v157
    %585 = vmatprep.subr.mxu0 0.0
    %586 = vmatpush2.msra.mxu0 0.0
    %587 = vmatprep.subr.mxu0 0.0
    %588 = vmatpush2.msra.mxu0 0.0
    %589 = vmatprep.subr.mxu0 0.0
    %590 = vmatpush2.msra.mxu0 0.0
    %591 = vmatprep.subr.mxu0 0.0
    %592 = vmatpush2.msra.mxu0 0.0
    %593 = vmatprep.subr.mxu0 0.0
    %594 = vmatpush2.msra.mxu0 0.0
    %595 = vmatprep.subr.mxu0 0.0
    %596 = vmatpush2.msra.mxu0 0.0
    %597 = vmatprep.subr.mxu0 0.0
    %598 = vmatpush2.msra.mxu0 0.0
    %599 = vmatprep.subr.mxu0 0.0
    %600 = vmatpush2.msra.mxu0 0.0
    %601 = vmatprep.subr.mxu0 0.0
    %602 = vmatpush2.msra.mxu0 0.0
    %603 = vmatprep.subr.mxu0 0.0
    %604 = vmatpush2.msra.mxu0 0.0
    %605 = vmatprep.subr.mxu0 0.0
    %606 = vmatpush2.msra.mxu0 0.0
    %607 = vmatprep.subr.mxu0 0.0
    %608 = vmatpush2.msra.mxu0 0.0
    %609 = vmatprep.subr.mxu0 0.0
    %610 = vmatpush2.msra.mxu0 0.0
    %611 = vmatprep.subr.mxu0 0.0
    %612 = vmatpush2.msra.mxu0 0.0
    %613 = vmatprep.subr.mxu0 0.0
    %614 = vmatpush2.msra.mxu0 0.0
    %615 = vmatprep.subr.mxu0 0.0
    %616 = vmatpush2.msra.mxu0 0.0
    %617 = vmatprep.mubr.f32.mxu0 0.0
    %618 = vmatmul.mubr.f32.gmra.mxu0 %v170
    %v619 = vpop.f32.mrf.mxu0
    %v620 = vadd.f32 %v166, %v619
    %v621 = vpop.f32.mrf.mxu0
    %622 = vmatprep.mubr.f32.mxu0 0.0
    %623 = vmatmul.mubr.f32.gmra.mxu0 %v173
    %v624 = vpop.f32.mrf.mxu0
    %v625 = vadd.f32 %v166, %v624
    %v626 = vpop.f32.mrf.mxu0
    %627 = vmatprep.mubr.f32.mxu0 0.0
    %628 = vmatmul.mubr.f32.gmra.mxu0 %v176
    %v629 = vpop.f32.mrf.mxu0
    %v630 = vadd.f32 %v166, %v629
    %v631 = vpop.f32.mrf.mxu0
    %632 = vmatprep.mubr.f32.mxu0 0.0
    %633 = vmatmul.mubr.f32.gmra.mxu0 %v179
    %v634 = vpop.f32.mrf.mxu0
    %v635 = vadd.f32 %v166, %v634
    %v636 = vpop.f32.mrf.mxu0
    %637 = vmatprep.mubr.f32.mxu0 0.0
    %638 = vmatmul.mubr.f32.gmra.mxu0 %v182
    %v639 = vpop.f32.mrf.mxu0
    %v640 = vadd.f32 %v166, %v639
    %v641 = vpop.f32.mrf.mxu0
    %642 = vmatprep.mubr.f32.mxu0 0.0
    %643 = vmatmul.mubr.f32.gmra.mxu0 %v185
    %v644 = vpop.f32.mrf.mxu0
    %v645 = vadd.f32 %v166, %v644
    %v646 = vpop.f32.mrf.mxu0
    %647 = vmatprep.mubr.f32.mxu0 0.0
    %648 = vmatmul.mubr.f32.gmra.mxu0 %v188
    %v649 = vpop.f32.mrf.mxu0
    %v650 = vadd.f32 %v166, %v649
    %v651 = vpop.f32.mrf.mxu0
    %652 = vmatprep.mubr.f32.mxu0 0.0
    %653 = vmatmul.mubr.f32.gmra.mxu0 %v191
    %v654 = vpop.f32.mrf.mxu0
    %v655 = vadd.f32 %v166, %v654
    %v656 = vpop.f32.mrf.mxu0
    %657 = vmatprep.mubr.f32.mxu0 0.0
    %658 = vmatmul.mubr.f32.gmra.mxu0 %v194
    %v659 = vpop.f32.mrf.mxu0
    %v660 = vadd.f32 %v166, %v659
    %v661 = vpop.f32.mrf.mxu0
    %662 = vmatprep.mubr.f32.mxu0 0.0
    %663 = vmatmul.mubr.f32.gmra.mxu0 %v197
    %v664 = vpop.f32.mrf.mxu0
    %v665 = vadd.f32 %v166, %v664
    %v666 = vpop.f32.mrf.mxu0
    %667 = vmatprep.mubr.f32.mxu0 0.0
    %668 = vmatmul.mubr.f32.gmra.mxu0 %v200
    %v669 = vpop.f32.mrf.mxu0
    %v670 = vadd.f32 %v166, %v669
    %v671 = vpop.f32.mrf.mxu0
    %672 = vmatprep.mubr.f32.mxu0 0.0
    %673 = vmatmul.mubr.f32.gmra.mxu0 %v203
    %v674 = vpop.f32.mrf.mxu0
    %v675 = vadd.f32 %v166, %v674
    %v676 = vpop.f32.mrf.mxu0
    %677 = vmatprep.mubr.f32.mxu0 0.0
    %678 = vmatmul.mubr.f32.gmra.mxu0 %v206
    %v679 = vpop.f32.mrf.mxu0
    %v680 = vadd.f32 %v166, %v679
    %v681 = vpop.f32.mrf.mxu0
    %682 = vmatprep.mubr.f32.mxu0 0.0
    %683 = vmatmul.mubr.f32.gmra.mxu0 %v209
    %v684 = vpop.f32.mrf.mxu0
    %v685 = vadd.f32 %v166, %v684
    %v686 = vpop.f32.mrf.mxu0
    %687 = vmatprep.mubr.f32.mxu0 0.0
    %688 = vmatmul.mubr.f32.gmra.mxu0 %v212
    %v689 = vpop.f32.mrf.mxu0
    %v690 = vadd.f32 %v166, %v689
    %v691 = vpop.f32.mrf.mxu0
    %692 = vmatprep.mubr.f32.mxu0 0.0
    %693 = vmatmul.mubr.f32.gmra.mxu0 %v215
    %v694 = vpop.f32.mrf.mxu0
    %v695 = vadd.f32 %v166, %v694
    %v696 = vpop.f32.mrf.mxu0
    %697 = vmatprep.mubr.f32.mxu0 0.0
    %698 = vmatmul.mubr.f32.gmra.mxu0 %v218
    %v699 = vpop.f32.mrf.mxu0
    %v700 = vadd.f32 %v166, %v699
    %v701 = vpop.f32.mrf.mxu0
    %702 = vmatprep.mubr.f32.mxu0 0.0
    %703 = vmatmul.mubr.f32.gmra.mxu0 %v221
    %v704 = vpop.f32.mrf.mxu0
    %v705 = vadd.f32 %v166, %v704
    %v706 = vpop.f32.mrf.mxu0
    %707 = vmatprep.mubr.f32.mxu0 0.0
    %708 = vmatmul.mubr.f32.gmra.mxu0 %v224
    %v709 = vpop.f32.mrf.mxu0
    %v710 = vadd.f32 %v166, %v709
    %v711 = vpop.f32.mrf.mxu0
    %712 = vmatprep.mubr.f32.mxu0 0.0
    %713 = vmatmul.mubr.f32.gmra.mxu0 %v227
    %v714 = vpop.f32.mrf.mxu0
    %v715 = vadd.f32 %v166, %v714
    %v716 = vpop.f32.mrf.mxu0
    %717 = vmatprep.mubr.f32.mxu0 0.0
    %718 = vmatmul.mubr.f32.gmra.mxu0 %v230
    %v719 = vpop.f32.mrf.mxu0
    %v720 = vadd.f32 %v166, %v719
    %v721 = vpop.f32.mrf.mxu0
    %722 = vmatprep.mubr.f32.mxu0 0.0
    %723 = vmatmul.mubr.f32.gmra.mxu0 %v233
    %v724 = vpop.f32.mrf.mxu0
    %v725 = vadd.f32 %v166, %v724
    %v726 = vpop.f32.mrf.mxu0
    %727 = vmatprep.mubr.f32.mxu0 0.0
    %728 = vmatmul.mubr.f32.gmra.mxu0 %v236
    %v729 = vpop.f32.mrf.mxu0
    %v730 = vadd.f32 %v166, %v729
    %v731 = vpop.f32.mrf.mxu0
    %732 = vmatprep.mubr.f32.mxu0 0.0
    %733 = vmatmul.mubr.f32.gmra.mxu0 %v239
    %v734 = vpop.f32.mrf.mxu0
    %v735 = vadd.f32 %v166, %v734
    %v736 = vpop.f32.mrf.mxu0
    %737 = vmatprep.mubr.f32.mxu0 0.0
    %738 = vmatmul.mubr.f32.gmra.mxu0 %v242
    %v739 = vpop.f32.mrf.mxu0
    %v740 = vadd.f32 %v166, %v739
    %v741 = vpop.f32.mrf.mxu0
    %742 = vmatprep.mubr.f32.mxu0 0.0
    %743 = vmatmul.mubr.f32.gmra.mxu0 %v245
    %v744 = vpop.f32.mrf.mxu0
    %v745 = vadd.f32 %v166, %v744
    %v746 = vpop.f32.mrf.mxu0
    %747 = vmatprep.mubr.f32.mxu0 0.0
    %748 = vmatmul.mubr.f32.gmra.mxu0 %v248
    %v749 = vpop.f32.mrf.mxu0
    %v750 = vadd.f32 %v166, %v749
    %v751 = vpop.f32.mrf.mxu0
    %752 = vmatprep.mubr.f32.mxu0 0.0
    %753 = vmatmul.mubr.f32.gmra.mxu0 %v251
    %v754 = vpop.f32.mrf.mxu0
    %v755 = vadd.f32 %v166, %v754
    %v756 = vpop.f32.mrf.mxu0
    %757 = vmatprep.mubr.f32.mxu0 0.0
    %758 = vmatmul.mubr.f32.gmra.mxu0 %v254
    %v759 = vpop.f32.mrf.mxu0
    %v760 = vadd.f32 %v166, %v759
    %v761 = vpop.f32.mrf.mxu0
    %762 = vmatprep.mubr.f32.mxu0 0.0
    %763 = vmatmul.mubr.f32.gmra.mxu0 %v257
    %v764 = vpop.f32.mrf.mxu0
    %v765 = vadd.f32 %v166, %v764
    %v766 = vpop.f32.mrf.mxu0
    %767 = vmatprep.mubr.f32.mxu0 0.0
    %768 = vmatmul.mubr.f32.gmra.mxu0 %v260
    %v769 = vpop.f32.mrf.mxu0
    %v770 = vadd.f32 %v166, %v769
    %v771 = vpop.f32.mrf.mxu0
    %772 = vmatprep.mubr.f32.mxu0 0.0
    %773 = vmatmul.mubr.f32.gmra.mxu0 %v263
    %v774 = vpop.f32.mrf.mxu0
    %v775 = vadd.f32 %v166, %v774
    %v776 = vpop.f32.mrf.mxu0
    %777 = vmatprep.mubr.f32.mxu0 0.0
    %778 = vmatmul.mubr.f32.gmra.mxu0 %v266
    %v779 = vpop.f32.mrf.mxu0
    %v780 = vadd.f32 %v166, %v779
    %v781 = vpop.f32.mrf.mxu0
    %782 = vmatprep.mubr.f32.mxu0 0.0
    %783 = vmatmul.mubr.f32.gmra.mxu0 %v269
    %v784 = vpop.f32.mrf.mxu0
    %v785 = vadd.f32 %v166, %v784
    %v786 = vpop.f32.mrf.mxu0
    %787 = vmatprep.mubr.f32.mxu0 0.0
    %788 = vmatmul.mubr.f32.gmra.mxu0 %v272
    %v789 = vpop.f32.mrf.mxu0
    %v790 = vadd.f32 %v166, %v789
    %v791 = vpop.f32.mrf.mxu0
    %792 = vmatprep.mubr.f32.mxu0 0.0
    %793 = vmatmul.mubr.f32.gmra.mxu0 %v275
    %v794 = vpop.f32.mrf.mxu0
    %v795 = vadd.f32 %v166, %v794
    %v796 = vpop.f32.mrf.mxu0
    %797 = vmatprep.mubr.f32.mxu0 0.0
    %798 = vmatmul.mubr.f32.gmra.mxu0 %v278
    %v799 = vpop.f32.mrf.mxu0
    %v800 = vadd.f32 %v166, %v799
    %v801 = vpop.f32.mrf.mxu0
    %802 = vmatprep.mubr.f32.mxu0 0.0
    %803 = vmatmul.mubr.f32.gmra.mxu0 %v281
    %v804 = vpop.f32.mrf.mxu0
    %v805 = vadd.f32 %v166, %v804
    %v806 = vpop.f32.mrf.mxu0
    %807 = vmatprep.mubr.f32.mxu0 0.0
    %808 = vmatmul.mubr.f32.gmra.mxu0 %v284
    %v809 = vpop.f32.mrf.mxu0
    %v810 = vadd.f32 %v166, %v809
    %v811 = vpop.f32.mrf.mxu0
    %812 = vmatprep.mubr.f32.mxu0 0.0
    %813 = vmatmul.mubr.f32.gmra.mxu0 %v287
    %v814 = vpop.f32.mrf.mxu0
    %v815 = vadd.f32 %v166, %v814
    %v816 = vpop.f32.mrf.mxu0
    %817 = vmatprep.mubr.f32.mxu0 0.0
    %818 = vmatmul.mubr.f32.gmra.mxu0 %v290
    %v819 = vpop.f32.mrf.mxu0
    %v820 = vadd.f32 %v166, %v819
    %v821 = vpop.f32.mrf.mxu0
    %822 = vmatprep.mubr.f32.mxu0 0.0
    %823 = vmatmul.mubr.f32.gmra.mxu0 %v293
    %v824 = vpop.f32.mrf.mxu0
    %v825 = vadd.f32 %v166, %v824
    %v826 = vpop.f32.mrf.mxu0
    %827 = vmatprep.mubr.f32.mxu0 0.0
    %828 = vmatmul.mubr.f32.gmra.mxu0 %v296
    %v829 = vpop.f32.mrf.mxu0
    %v830 = vadd.f32 %v166, %v829
    %v831 = vpop.f32.mrf.mxu0
    %832 = vmatprep.mubr.f32.mxu0 0.0
    %833 = vmatmul.mubr.f32.gmra.mxu0 %v299
    %v834 = vpop.f32.mrf.mxu0
    %v835 = vadd.f32 %v166, %v834
    %v836 = vpop.f32.mrf.mxu0
    %837 = vmatprep.mubr.f32.mxu0 0.0
    %838 = vmatmul.mubr.f32.gmra.mxu0 %v302
    %v839 = vpop.f32.mrf.mxu0
    %v840 = vadd.f32 %v166, %v839
    %v841 = vpop.f32.mrf.mxu0
    %842 = vmatprep.mubr.f32.mxu0 0.0
    %843 = vmatmul.mubr.f32.gmra.mxu0 %v305
    %v844 = vpop.f32.mrf.mxu0
    %v845 = vadd.f32 %v166, %v844
    %v846 = vpop.f32.mrf.mxu0
    %847 = vmatprep.mubr.f32.mxu0 0.0
    %848 = vmatmul.mubr.f32.gmra.mxu0 %v308
    %v849 = vpop.f32.mrf.mxu0
    %v850 = vadd.f32 %v166, %v849
    %v851 = vpop.f32.mrf.mxu0
    %852 = vmatprep.mubr.f32.mxu0 0.0
    %853 = vmatmul.mubr.f32.gmra.mxu0 %v311
    %v854 = vpop.f32.mrf.mxu0
    %v855 = vadd.f32 %v166, %v854
    %v856 = vpop.f32.mrf.mxu0
    %857 = vmatprep.mubr.f32.mxu0 0.0
    %858 = vmatmul.mubr.f32.gmra.mxu0 %v314
    %v859 = vpop.f32.mrf.mxu0
    %v860 = vadd.f32 %v166, %v859
    %v861 = vpop.f32.mrf.mxu0
    %862 = vmatprep.mubr.f32.mxu0 0.0
    %863 = vmatmul.mubr.f32.gmra.mxu0 %v317
    %v864 = vpop.f32.mrf.mxu0
    %v865 = vadd.f32 %v166, %v864
    %v866 = vpop.f32.mrf.mxu0
    %867 = vmatprep.mubr.f32.mxu0 0.0
    %868 = vmatmul.mubr.f32.gmra.mxu0 %v320
    %v869 = vpop.f32.mrf.mxu0
    %v870 = vadd.f32 %v166, %v869
    %v871 = vpop.f32.mrf.mxu0
    %872 = vmatprep.mubr.f32.mxu0 0.0
    %873 = vmatmul.mubr.f32.gmra.mxu0 %v323
    %v874 = vpop.f32.mrf.mxu0
    %v875 = vadd.f32 %v166, %v874
    %v876 = vpop.f32.mrf.mxu0
    %877 = vmatprep.mubr.f32.mxu0 0.0
    %878 = vmatmul.mubr.f32.gmra.mxu0 %v326
    %v879 = vpop.f32.mrf.mxu0
    %v880 = vadd.f32 %v166, %v879
    %v881 = vpop.f32.mrf.mxu0
    %882 = vmatprep.mubr.f32.mxu0 0.0
    %883 = vmatmul.mubr.f32.gmra.mxu0 %v329
    %v884 = vpop.f32.mrf.mxu0
    %v885 = vadd.f32 %v166, %v884
    %v886 = vpop.f32.mrf.mxu0
    %887 = vmatprep.mubr.f32.mxu0 0.0
    %888 = vmatmul.mubr.f32.gmra.mxu0 %v332
    %v889 = vpop.f32.mrf.mxu0
    %v890 = vadd.f32 %v166, %v889
    %v891 = vpop.f32.mrf.mxu0
    %892 = vmatprep.mubr.f32.mxu0 0.0
    %893 = vmatmul.mubr.f32.gmra.mxu0 %v335
    %v894 = vpop.f32.mrf.mxu0
    %v895 = vadd.f32 %v166, %v894
    %v896 = vpop.f32.mrf.mxu0
    %897 = vmatprep.mubr.f32.mxu0 0.0
    %898 = vmatmul.mubr.f32.gmra.mxu0 %v338
    %v899 = vpop.f32.mrf.mxu0
    %v900 = vadd.f32 %v166, %v899
    %v901 = vpop.f32.mrf.mxu0
    %902 = vmatprep.mubr.f32.mxu0 0.0
    %903 = vmatmul.mubr.f32.gmra.mxu0 %v341
    %v904 = vpop.f32.mrf.mxu0
    %v905 = vadd.f32 %v166, %v904
    %v906 = vpop.f32.mrf.mxu0
    %907 = vmatprep.mubr.f32.mxu0 0.0
    %908 = vmatmul.mubr.f32.gmra.mxu0 %v344
    %v909 = vpop.f32.mrf.mxu0
    %v910 = vadd.f32 %v166, %v909
    %v911 = vpop.f32.mrf.mxu0
    %912 = vmatprep.mubr.f32.mxu0 0.0
    %913 = vmatmul.mubr.f32.gmra.mxu0 %v347
    %v914 = vpop.f32.mrf.mxu0
    %v915 = vadd.f32 %v166, %v914
    %v916 = vpop.f32.mrf.mxu0
    %917 = vmatprep.mubr.f32.mxu0 0.0
    %918 = vmatmul.mubr.f32.gmra.mxu0 %v350
    %v919 = vpop.f32.mrf.mxu0
    %v920 = vadd.f32 %v166, %v919
    %v921 = vpop.f32.mrf.mxu0
    %922 = vmatprep.mubr.f32.mxu0 0.0
    %923 = vmatmul.mubr.f32.gmra.mxu0 %v353
    %v924 = vpop.f32.mrf.mxu0
    %v925 = vadd.f32 %v166, %v924
    %v926 = vpop.f32.mrf.mxu0
    %927 = vmatprep.mubr.f32.mxu0 0.0
    %928 = vmatmul.mubr.f32.gmra.mxu0 %v356
    %v929 = vpop.f32.mrf.mxu0
    %v930 = vadd.f32 %v166, %v929
    %v931 = vpop.f32.mrf.mxu0
    %932 = vmatprep.mubr.f32.mxu0 0.0
    %933 = vmatmul.mubr.f32.gmra.mxu0 %v359
    %v934 = vpop.f32.mrf.mxu0
    %v935 = vadd.f32 %v166, %v934
    %v936 = vpop.f32.mrf.mxu0
    %937 = vmatprep.mubr.f32.mxu0 0.0
    %938 = vmatmul.mubr.f32.gmra.mxu0 %v362
    %v939 = vpop.f32.mrf.mxu0
    %v940 = vadd.f32 %v166, %v939
    %v941 = vpop.f32.mrf.mxu0
    %942 = vmatprep.mubr.f32.mxu0 0.0
    %943 = vmatmul.mubr.f32.gmra.mxu0 %v365
    %v944 = vpop.f32.mrf.mxu0
    %v945 = vadd.f32 %v166, %v944
    %v946 = vpop.f32.mrf.mxu0
    %947 = vmatprep.mubr.f32.mxu0 0.0
    %948 = vmatmul.mubr.f32.gmra.mxu0 %v368
    %v949 = vpop.f32.mrf.mxu0
    %v950 = vadd.f32 %v166, %v949
    %v951 = vpop.f32.mrf.mxu0
    %952 = vmatprep.mubr.f32.mxu0 0.0
    %953 = vmatmul.mubr.f32.gmra.mxu0 %v371
    %v954 = vpop.f32.mrf.mxu0
    %v955 = vadd.f32 %v166, %v954
    %v956 = vpop.f32.mrf.mxu0
    %957 = vmatprep.mubr.f32.mxu0 0.0
    %958 = vmatmul.mubr.f32.gmra.mxu0 %v374
    %v959 = vpop.f32.mrf.mxu0
    %v960 = vadd.f32 %v166, %v959
    %v961 = vpop.f32.mrf.mxu0
    %962 = vmatprep.mubr.f32.mxu0 0.0
    %963 = vmatmul.mubr.f32.gmra.mxu0 %v377
    %v964 = vpop.f32.mrf.mxu0
    %v965 = vadd.f32 %v166, %v964
    %v966 = vpop.f32.mrf.mxu0
    %967 = vmatprep.mubr.f32.mxu0 0.0
    %968 = vmatmul.mubr.f32.gmra.mxu0 %v380
    %v969 = vpop.f32.mrf.mxu0
    %v970 = vadd.f32 %v166, %v969
    %v971 = vpop.f32.mrf.mxu0
    %972 = vmatprep.mubr.f32.mxu0 0.0
    %973 = vmatmul.mubr.f32.gmra.mxu0 %v383
    %v974 = vpop.f32.mrf.mxu0
    %v975 = vadd.f32 %v166, %v974
    %v976 = vpop.f32.mrf.mxu0
    %977 = vmatprep.mubr.f32.mxu0 0.0
    %978 = vmatmul.mubr.f32.gmra.mxu0 %v386
    %v979 = vpop.f32.mrf.mxu0
    %v980 = vadd.f32 %v166, %v979
    %v981 = vpop.f32.mrf.mxu0
    %982 = vmatprep.mubr.f32.mxu0 0.0
    %983 = vmatmul.mubr.f32.gmra.mxu0 %v389
    %v984 = vpop.f32.mrf.mxu0
    %v985 = vadd.f32 %v166, %v984
    %v986 = vpop.f32.mrf.mxu0
    %987 = vmatprep.mubr.f32.mxu0 0.0
    %988 = vmatmul.mubr.f32.gmra.mxu0 %v392
    %v989 = vpop.f32.mrf.mxu0
    %v990 = vadd.f32 %v166, %v989
    %v991 = vpop.f32.mrf.mxu0
    %992 = vmatprep.mubr.f32.mxu0 0.0
    %993 = vmatmul.mubr.f32.gmra.mxu0 %v395
    %v994 = vpop.f32.mrf.mxu0
    %v995 = vadd.f32 %v166, %v994
    %v996 = vpop.f32.mrf.mxu0
    %997 = vmatprep.mubr.f32.mxu0 0.0
    %998 = vmatmul.mubr.f32.gmra.mxu0 %v398
    %v999 = vpop.f32.mrf.mxu0
    %v1000 = vadd.f32 %v166, %v999
    %v1001 = vpop.f32.mrf.mxu0
    %1002 = vmatprep.mubr.f32.mxu0 0.0
    %1003 = vmatmul.mubr.f32.gmra.mxu0 %v401
    %v1004 = vpop.f32.mrf.mxu0
    %v1005 = vadd.f32 %v166, %v1004
    %v1006 = vpop.f32.mrf.mxu0
    %1007 = vmatprep.mubr.f32.mxu0 0.0
    %1008 = vmatmul.mubr.f32.gmra.mxu0 %v404
    %v1009 = vpop.f32.mrf.mxu0
    %v1010 = vadd.f32 %v166, %v1009
    %v1011 = vpop.f32.mrf.mxu0
    %1012 = vmatprep.mubr.f32.mxu0 0.0
    %1013 = vmatmul.mubr.f32.gmra.mxu0 %v407
    %v1014 = vpop.f32.mrf.mxu0
    %v1015 = vadd.f32 %v166, %v1014
    %v1016 = vpop.f32.mrf.mxu0
    %1017 = vmatprep.mubr.f32.mxu0 0.0
    %1018 = vmatmul.mubr.f32.gmra.mxu0 %v410
    %v1019 = vpop.f32.mrf.mxu0
    %v1020 = vadd.f32 %v166, %v1019
    %v1021 = vpop.f32.mrf.mxu0
    %1022 = vmatprep.mubr.f32.mxu0 0.0
    %1023 = vmatmul.mubr.f32.gmra.mxu0 %v413
    %v1024 = vpop.f32.mrf.mxu0
    %v1025 = vadd.f32 %v166, %v1024
    %v1026 = vpop.f32.mrf.mxu0
    %1027 = vmatprep.mubr.f32.mxu0 0.0
    %1028 = vmatmul.mubr.f32.gmra.mxu0 %v416
    %v1029 = vpop.f32.mrf.mxu0
    %v1030 = vadd.f32 %v166, %v1029
    %v1031 = vpop.f32.mrf.mxu0
    %1032 = vmatprep.mubr.f32.mxu0 0.0
    %1033 = vmatmul.mubr.f32.gmra.mxu0 %v419
    %v1034 = vpop.f32.mrf.mxu0
    %v1035 = vadd.f32 %v166, %v1034
    %v1036 = vpop.f32.mrf.mxu0
    %1037 = vmatprep.mubr.f32.mxu0 0.0
    %1038 = vmatmul.mubr.f32.gmra.mxu0 %v422
    %v1039 = vpop.f32.mrf.mxu0
    %v1040 = vadd.f32 %v166, %v1039
    %v1041 = vpop.f32.mrf.mxu0
    %1042 = vmatprep.mubr.f32.mxu0 0.0
    %1043 = vmatmul.mubr.f32.gmra.mxu0 %v425
    %v1044 = vpop.f32.mrf.mxu0
    %v1045 = vadd.f32 %v166, %v1044
    %v1046 = vpop.f32.mrf.mxu0
    %1047 = vmatprep.mubr.f32.mxu0 0.0
    %1048 = vmatmul.mubr.f32.gmra.mxu0 %v428
    %v1049 = vpop.f32.mrf.mxu0
    %v1050 = vadd.f32 %v166, %v1049
    %v1051 = vpop.f32.mrf.mxu0
    %1052 = vmatprep.mubr.f32.mxu0 0.0
    %1053 = vmatmul.mubr.f32.gmra.mxu0 %v431
    %v1054 = vpop.f32.mrf.mxu0
    %v1055 = vadd.f32 %v166, %v1054
    %v1056 = vpop.f32.mrf.mxu0
    %1057 = vmatprep.mubr.f32.mxu0 0.0
    %1058 = vmatmul.mubr.f32.gmra.mxu0 %v434
    %v1059 = vpop.f32.mrf.mxu0
    %v1060 = vadd.f32 %v166, %v1059
    %v1061 = vpop.f32.mrf.mxu0
    %1062 = vmatprep.mubr.f32.mxu0 0.0
    %1063 = vmatmul.mubr.f32.gmra.mxu0 %v437
    %v1064 = vpop.f32.mrf.mxu0
    %v1065 = vadd.f32 %v166, %v1064
    %v1066 = vpop.f32.mrf.mxu0
    %1067 = vmatprep.mubr.f32.mxu0 0.0
    %1068 = vmatmul.mubr.f32.gmra.mxu0 %v440
    %v1069 = vpop.f32.mrf.mxu0
    %v1070 = vadd.f32 %v166, %v1069
    %v1071 = vpop.f32.mrf.mxu0
    %1072 = vmatprep.mubr.f32.mxu0 0.0
    %1073 = vmatmul.mubr.f32.gmra.mxu0 %v443
    %v1074 = vpop.f32.mrf.mxu0
    %v1075 = vadd.f32 %v166, %v1074
    %v1076 = vpop.f32.mrf.mxu0
    %1077 = vmatprep.mubr.f32.mxu0 0.0
    %1078 = vmatmul.mubr.f32.gmra.mxu0 %v446
    %v1079 = vpop.f32.mrf.mxu0
    %v1080 = vadd.f32 %v166, %v1079
    %v1081 = vpop.f32.mrf.mxu0
    %1082 = vmatprep.mubr.f32.mxu0 0.0
    %1083 = vmatmul.mubr.f32.gmra.mxu0 %v449
    %v1084 = vpop.f32.mrf.mxu0
    %v1085 = vadd.f32 %v166, %v1084
    %v1086 = vpop.f32.mrf.mxu0
    %1087 = vmatprep.mubr.f32.mxu0 0.0
    %1088 = vmatmul.mubr.f32.gmra.mxu0 %v452
    %v1089 = vpop.f32.mrf.mxu0
    %v1090 = vadd.f32 %v166, %v1089
    %v1091 = vpop.f32.mrf.mxu0
    %1092 = vmatprep.mubr.f32.mxu0 0.0
    %1093 = vmatmul.mubr.f32.gmra.mxu0 %v455
    %v1094 = vpop.f32.mrf.mxu0
    %v1095 = vadd.f32 %v166, %v1094
    %v1096 = vpop.f32.mrf.mxu0
    %1097 = vmatprep.mubr.f32.mxu0 0.0
    %1098 = vmatmul.mubr.f32.gmra.mxu0 %v458
    %v1099 = vpop.f32.mrf.mxu0
    %v1100 = vadd.f32 %v166, %v1099
    %v1101 = vpop.f32.mrf.mxu0
    %1102 = vmatprep.mubr.f32.mxu0 0.0
    %1103 = vmatmul.mubr.f32.gmra.mxu0 %v461
    %v1104 = vpop.f32.mrf.mxu0
    %v1105 = vadd.f32 %v166, %v1104
    %v1106 = vpop.f32.mrf.mxu0
    %1107 = vmatprep.mubr.f32.mxu0 0.0
    %1108 = vmatmul.mubr.f32.gmra.mxu0 %v464
    %v1109 = vpop.f32.mrf.mxu0
    %v1110 = vadd.f32 %v166, %v1109
    %v1111 = vpop.f32.mrf.mxu0
    %1112 = vmatprep.mubr.f32.mxu0 0.0
    %1113 = vmatmul.mubr.f32.gmra.mxu0 %v467
    %v1114 = vpop.f32.mrf.mxu0
    %v1115 = vadd.f32 %v166, %v1114
    %v1116 = vpop.f32.mrf.mxu0
    %1117 = vmatprep.mubr.f32.mxu0 0.0
    %1118 = vmatmul.mubr.f32.gmra.mxu0 %v470
    %v1119 = vpop.f32.mrf.mxu0
    %v1120 = vadd.f32 %v166, %v1119
    %v1121 = vpop.f32.mrf.mxu0
    %1122 = vmatprep.mubr.f32.mxu0 0.0
    %1123 = vmatmul.mubr.f32.gmra.mxu0 %v473
    %v1124 = vpop.f32.mrf.mxu0
    %v1125 = vadd.f32 %v166, %v1124
    %v1126 = vpop.f32.mrf.mxu0
    %1127 = vmatprep.mubr.f32.mxu0 0.0
    %1128 = vmatmul.mubr.f32.gmra.mxu0 %v476
    %v1129 = vpop.f32.mrf.mxu0
    %v1130 = vadd.f32 %v166, %v1129
    %v1131 = vpop.f32.mrf.mxu0
    %1132 = vmatprep.mubr.f32.mxu0 0.0
    %1133 = vmatmul.mubr.f32.gmra.mxu0 %v479
    %v1134 = vpop.f32.mrf.mxu0
    %v1135 = vadd.f32 %v166, %v1134
    %v1136 = vpop.f32.mrf.mxu0
    %1137 = vmatprep.mubr.f32.mxu0 0.0
    %1138 = vmatmul.mubr.f32.gmra.mxu0 %v482
    %v1139 = vpop.f32.mrf.mxu0
    %v1140 = vadd.f32 %v166, %v1139
    %v1141 = vpop.f32.mrf.mxu0
    %1142 = vmatprep.mubr.f32.mxu0 0.0
    %1143 = vmatmul.mubr.f32.gmra.mxu0 %v485
    %v1144 = vpop.f32.mrf.mxu0
    %v1145 = vadd.f32 %v166, %v1144
    %v1146 = vpop.f32.mrf.mxu0
    %1147 = vmatprep.mubr.f32.mxu0 0.0
    %1148 = vmatmul.mubr.f32.gmra.mxu0 %v488
    %v1149 = vpop.f32.mrf.mxu0
    %v1150 = vadd.f32 %v166, %v1149
    %v1151 = vpop.f32.mrf.mxu0
    %1152 = vmatprep.mubr.f32.mxu0 0.0
    %1153 = vmatmul.mubr.f32.gmra.mxu0 %v491
    %v1154 = vpop.f32.mrf.mxu0
    %v1155 = vadd.f32 %v166, %v1154
    %v1156 = vpop.f32.mrf.mxu0
    %1157 = vmatprep.mubr.f32.mxu0 0.0
    %1158 = vmatmul.mubr.f32.gmra.mxu0 %v494
    %v1159 = vpop.f32.mrf.mxu0
    %v1160 = vadd.f32 %v166, %v1159
    %v1161 = vpop.f32.mrf.mxu0
    %1162 = vmatprep.mubr.f32.mxu0 0.0
    %1163 = vmatmul.mubr.f32.gmra.mxu0 %v497
    %v1164 = vpop.f32.mrf.mxu0
    %v1165 = vadd.f32 %v166, %v1164
    %v1166 = vpop.f32.mrf.mxu0
    %1167 = vmatprep.mubr.f32.mxu0 0.0
    %1168 = vmatmul.mubr.f32.gmra.mxu0 %v500
    %v1169 = vpop.f32.mrf.mxu0
    %v1170 = vadd.f32 %v166, %v1169
    %v1171 = vpop.f32.mrf.mxu0
    %1172 = vmatprep.mubr.f32.mxu0 0.0
    %1173 = vmatmul.mubr.f32.gmra.mxu0 %v503
    %v1174 = vpop.f32.mrf.mxu0
    %v1175 = vadd.f32 %v166, %v1174
    %v1176 = vpop.f32.mrf.mxu0
    %1177 = vmatprep.mubr.f32.mxu0 0.0
    %1178 = vmatmul.mubr.f32.gmra.mxu0 %v506
    %v1179 = vpop.f32.mrf.mxu0
    %v1180 = vadd.f32 %v166, %v1179
    %v1181 = vpop.f32.mrf.mxu0
    %1182 = vmatprep.mubr.f32.mxu0 0.0
    %1183 = vmatmul.mubr.f32.gmra.mxu0 %v509
    %v1184 = vpop.f32.mrf.mxu0
    %v1185 = vadd.f32 %v166, %v1184
    %v1186 = vpop.f32.mrf.mxu0
    %1187 = vmatprep.mubr.f32.mxu0 0.0
    %1188 = vmatmul.mubr.f32.gmra.mxu0 %v512
    %v1189 = vpop.f32.mrf.mxu0
    %v1190 = vadd.f32 %v166, %v1189
    %v1191 = vpop.f32.mrf.mxu0
    %1192 = vmatprep.mubr.f32.mxu0 0.0
    %1193 = vmatmul.mubr.f32.gmra.mxu0 %v515
    %v1194 = vpop.f32.mrf.mxu0
    %v1195 = vadd.f32 %v166, %v1194
    %v1196 = vpop.f32.mrf.mxu0
    %1197 = vmatprep.mubr.f32.mxu0 0.0
    %1198 = vmatmul.mubr.f32.gmra.mxu0 %v518
    %v1199 = vpop.f32.mrf.mxu0
    %v1200 = vadd.f32 %v166, %v1199
    %v1201 = vpop.f32.mrf.mxu0
    %1202 = vmatprep.mubr.f32.mxu0 0.0
    %1203 = vmatmul.mubr.f32.gmra.mxu0 %v521
    %v1204 = vpop.f32.mrf.mxu0
    %v1205 = vadd.f32 %v166, %v1204
    %v1206 = vpop.f32.mrf.mxu0
    %1207 = vmatprep.mubr.f32.mxu0 0.0
    %1208 = vmatmul.mubr.f32.gmra.mxu0 %v524
    %v1209 = vpop.f32.mrf.mxu0
    %v1210 = vadd.f32 %v166, %v1209
    %v1211 = vpop.f32.mrf.mxu0
    %1212 = vmatprep.mubr.f32.mxu0 0.0
    %1213 = vmatmul.mubr.f32.gmra.mxu0 %v527
    %v1214 = vpop.f32.mrf.mxu0
    %v1215 = vadd.f32 %v166, %v1214
    %v1216 = vpop.f32.mrf.mxu0
    %1217 = vmatprep.mubr.f32.mxu0 0.0
    %1218 = vmatmul.mubr.f32.gmra.mxu0 %v530
    %v1219 = vpop.f32.mrf.mxu0
    %v1220 = vadd.f32 %v166, %v1219
    %v1221 = vpop.f32.mrf.mxu0
    %1222 = vmatprep.mubr.f32.mxu0 0.0
    %1223 = vmatmul.mubr.f32.gmra.mxu0 %v533
    %v1224 = vpop.f32.mrf.mxu0
    %v1225 = vadd.f32 %v166, %v1224
    %v1226 = vpop.f32.mrf.mxu0
    %1227 = vmatprep.mubr.f32.mxu0 0.0
    %1228 = vmatmul.mubr.f32.gmra.mxu0 %v536
    %v1229 = vpop.f32.mrf.mxu0
    %v1230 = vadd.f32 %v166, %v1229
    %v1231 = vpop.f32.mrf.mxu0
    %1232 = vmatprep.mubr.f32.mxu0 0.0
    %1233 = vmatmul.mubr.f32.gmra.mxu0 %v539
    %v1234 = vpop.f32.mrf.mxu0
    %v1235 = vadd.f32 %v166, %v1234
    %v1236 = vpop.f32.mrf.mxu0
    %1237 = vmatprep.mubr.f32.mxu0 0.0
    %1238 = vmatmul.mubr.f32.gmra.mxu0 %v542
    %v1239 = vpop.f32.mrf.mxu0
    %v1240 = vadd.f32 %v166, %v1239
    %v1241 = vpop.f32.mrf.mxu0
    %1242 = vmatprep.mubr.f32.mxu0 0.0
    %1243 = vmatmul.mubr.f32.gmra.mxu0 %v545
    %v1244 = vpop.f32.mrf.mxu0
    %v1245 = vadd.f32 %v166, %v1244
    %v1246 = vpop.f32.mrf.mxu0
    %1247 = vmatprep.mubr.f32.mxu0 0.0
    %1248 = vmatmul.mubr.f32.gmra.mxu0 %v548
    %v1249 = vpop.f32.mrf.mxu0
    %v1250 = vadd.f32 %v166, %v1249
    %v1251 = vpop.f32.mrf.mxu0
    %1252 = vmatprep.mubr.f32.mxu0 0.0
    %1253 = vmatmul.mubr.f32.gmra.mxu0 %v551
    %v1254 = vpop.f32.mrf.mxu0
    %v1255 = vadd.f32 %v166, %v1254
    %v1256 = vpop.f32.mrf.mxu0
    %1257 = vdwg.mxu0
    %v1258 = vmax.f32 %v620, 0.0
    %v1259 = vmax.f32 %v625, 0.0
    %v1260 = vmax.f32 %v630, 0.0
    %v1261 = vmax.f32 %v635, 0.0
    %v1262 = vmax.f32 %v640, 0.0
    %v1263 = vmax.f32 %v645, 0.0
    %v1264 = vmax.f32 %v650, 0.0
    %v1265 = vmax.f32 %v655, 0.0
    %v1266 = vmax.f32 %v660, 0.0
    %v1267 = vmax.f32 %v665, 0.0
    %v1268 = vmax.f32 %v670, 0.0
    %v1269 = vmax.f32 %v675, 0.0
    %v1270 = vmax.f32 %v680, 0.0
    %v1271 = vmax.f32 %v685, 0.0
    %v1272 = vmax.f32 %v690, 0.0
    %v1273 = vmax.f32 %v695, 0.0
    %v1274 = vmax.f32 %v700, 0.0
    %v1275 = vmax.f32 %v705, 0.0
    %v1276 = vmax.f32 %v710, 0.0
    %v1277 = vmax.f32 %v715, 0.0
    %v1278 = vmax.f32 %v720, 0.0
    %v1279 = vmax.f32 %v725, 0.0
    %v1280 = vmax.f32 %v730, 0.0
    %v1281 = vmax.f32 %v735, 0.0
    %v1282 = vmax.f32 %v740, 0.0
    %v1283 = vmax.f32 %v745, 0.0
    %v1284 = vmax.f32 %v750, 0.0
    %v1285 = vmax.f32 %v755, 0.0
    %v1286 = vmax.f32 %v760, 0.0
    %v1287 = vmax.f32 %v765, 0.0
    %v1288 = vmax.f32 %v770, 0.0
    %v1289 = vmax.f32 %v775, 0.0
    %v1290 = vmax.f32 %v780, 0.0
    %v1291 = vmax.f32 %v785, 0.0
    %v1292 = vmax.f32 %v790, 0.0
    %v1293 = vmax.f32 %v795, 0.0
    %v1294 = vmax.f32 %v800, 0.0
    %v1295 = vmax.f32 %v805, 0.0
    %v1296 = vmax.f32 %v810, 0.0
    %v1297 = vmax.f32 %v815, 0.0
    %v1298 = vmax.f32 %v820, 0.0
    %v1299 = vmax.f32 %v825, 0.0
    %v1300 = vmax.f32 %v830, 0.0
    %v1301 = vmax.f32 %v835, 0.0
    %v1302 = vmax.f32 %v840, 0.0
    %v1303 = vmax.f32 %v845, 0.0
    %v1304 = vmax.f32 %v850, 0.0
    %v1305 = vmax.f32 %v855, 0.0
    %v1306 = vmax.f32 %v860, 0.0
    %v1307 = vmax.f32 %v865, 0.0
    %v1308 = vmax.f32 %v870, 0.0
    %v1309 = vmax.f32 %v875, 0.0
    %v1310 = vmax.f32 %v880, 0.0
    %v1311 = vmax.f32 %v885, 0.0
    %v1312 = vmax.f32 %v890, 0.0
    %v1313 = vmax.f32 %v895, 0.0
    %v1314 = vmax.f32 %v900, 0.0
    %v1315 = vmax.f32 %v905, 0.0
    %v1316 = vmax.f32 %v910, 0.0
    %v1317 = vmax.f32 %v915, 0.0
    %v1318 = vmax.f32 %v920, 0.0
    %v1319 = vmax.f32 %v925, 0.0
    %v1320 = vmax.f32 %v930, 0.0
    %v1321 = vmax.f32 %v935, 0.0
    %v1322 = vmax.f32 %v940, 0.0
    %v1323 = vmax.f32 %v945, 0.0
    %v1324 = vmax.f32 %v950, 0.0
    %v1325 = vmax.f32 %v955, 0.0
    %v1326 = vmax.f32 %v960, 0.0
    %v1327 = vmax.f32 %v965, 0.0
    %v1328 = vmax.f32 %v970, 0.0
    %v1329 = vmax.f32 %v975, 0.0
    %v1330 = vmax.f32 %v980, 0.0
    %v1331 = vmax.f32 %v985, 0.0
    %v1332 = vmax.f32 %v990, 0.0
    %v1333 = vmax.f32 %v995, 0.0
    %v1334 = vmax.f32 %v1000, 0.0
    %v1335 = vmax.f32 %v1005, 0.0
    %v1336 = vmax.f32 %v1010, 0.0
    %v1337 = vmax.f32 %v1015, 0.0
    %v1338 = vmax.f32 %v1020, 0.0
    %v1339 = vmax.f32 %v1025, 0.0
    %v1340 = vmax.f32 %v1030, 0.0
    %v1341 = vmax.f32 %v1035, 0.0
    %v1342 = vmax.f32 %v1040, 0.0
    %v1343 = vmax.f32 %v1045, 0.0
    %v1344 = vmax.f32 %v1050, 0.0
    %v1345 = vmax.f32 %v1055, 0.0
    %v1346 = vmax.f32 %v1060, 0.0
    %v1347 = vmax.f32 %v1065, 0.0
    %v1348 = vmax.f32 %v1070, 0.0
    %v1349 = vmax.f32 %v1075, 0.0
    %v1350 = vmax.f32 %v1080, 0.0
    %v1351 = vmax.f32 %v1085, 0.0
    %v1352 = vmax.f32 %v1090, 0.0
    %v1353 = vmax.f32 %v1095, 0.0
    %v1354 = vmax.f32 %v1100, 0.0
    %v1355 = vmax.f32 %v1105, 0.0
    %v1356 = vmax.f32 %v1110, 0.0
    %v1357 = vmax.f32 %v1115, 0.0
    %v1358 = vmax.f32 %v1120, 0.0
    %v1359 = vmax.f32 %v1125, 0.0
    %v1360 = vmax.f32 %v1130, 0.0
    %v1361 = vmax.f32 %v1135, 0.0
    %v1362 = vmax.f32 %v1140, 0.0
    %v1363 = vmax.f32 %v1145, 0.0
    %v1364 = vmax.f32 %v1150, 0.0
    %v1365 = vmax.f32 %v1155, 0.0
    %v1366 = vmax.f32 %v1160, 0.0
    %v1367 = vmax.f32 %v1165, 0.0
    %v1368 = vmax.f32 %v1170, 0.0
    %v1369 = vmax.f32 %v1175, 0.0
    %v1370 = vmax.f32 %v1180, 0.0
    %v1371 = vmax.f32 %v1185, 0.0
    %v1372 = vmax.f32 %v1190, 0.0
    %v1373 = vmax.f32 %v1195, 0.0
    %v1374 = vmax.f32 %v1200, 0.0
    %v1375 = vmax.f32 %v1205, 0.0
    %v1376 = vmax.f32 %v1210, 0.0
    %v1377 = vmax.f32 %v1215, 0.0
    %v1378 = vmax.f32 %v1220, 0.0
    %v1379 = vmax.f32 %v1225, 0.0
    %v1380 = vmax.f32 %v1230, 0.0
    %v1381 = vmax.f32 %v1235, 0.0
    %v1382 = vmax.f32 %v1240, 0.0
    %v1383 = vmax.f32 %v1245, 0.0
    %v1384 = vmax.f32 %v1250, 0.0
    %v1385 = vmax.f32 %v1255, 0.0
    %v1386 = vld [vmem:[%s3] sm:$0xff]
    %v1387 = vld [vmem:[%s3 + $0x8] sm:$0xff]
    %v1388 = vld [vmem:[%s3 + $0x10] sm:$0xff]
    %v1389 = vld [vmem:[%s3 + $0x18] sm:$0xff]
    %v1390 = vld [vmem:[%s3 + $0x20] sm:$0xff]
    %v1391 = vld [vmem:[%s3 + $0x28] sm:$0xff]
    %v1392 = vld [vmem:[%s3 + $0x30] sm:$0xff]
    %v1393 = vld [vmem:[%s3 + $0x38] sm:$0xff]
    %v1394 = vld [vmem:[%s3 + $0x40] sm:$0xff]
    %v1395 = vld [vmem:[%s3 + $0x48] sm:$0xff]
    %v1396 = vld [vmem:[%s3 + $0x50] sm:$0xff]
    %v1397 = vld [vmem:[%s3 + $0x58] sm:$0xff]
    %v1398 = vld [vmem:[%s3 + $0x60] sm:$0xff]
    %v1399 = vld [vmem:[%s3 + $0x68] sm:$0xff]
    %v1400 = vld [vmem:[%s3 + $0x70] sm:$0xff]
    %v1401 = vld [vmem:[%s3 + $0x78] sm:$0xff]
    %v1402 = vld [vmem:[%s4] sm:$0x1]
    %v1404 = vlaneseq
    %v1405 = vshrl.u32 %v1404, 7
    %v1406 = vsub.s32 0, %v1405
    %v1407 = vrot.slane %v1402, %v1406
    %1409 = vmatprep.subr.mxu0 0.0
    %1410 = vmatpush1.msra.mxu0 %v1401
    %1411 = vmatprep.subr.mxu0 0.0
    %1412 = vmatpush1.msra.mxu0 %v1400
    %1413 = vmatprep.subr.mxu0 0.0
    %1414 = vmatpush1.msra.mxu0 %v1399
    %1415 = vmatprep.subr.mxu0 0.0
    %1416 = vmatpush1.msra.mxu0 %v1398
    %1417 = vmatprep.subr.mxu0 0.0
    %1418 = vmatpush1.msra.mxu0 %v1397
    %1419 = vmatprep.subr.mxu0 0.0
    %1420 = vmatpush1.msra.mxu0 %v1396
    %1421 = vmatprep.subr.mxu0 0.0
    %1422 = vmatpush1.msra.mxu0 %v1395
    %1423 = vmatprep.subr.mxu0 0.0
    %1424 = vmatpush1.msra.mxu0 %v1394
    %1425 = vmatprep.subr.mxu0 0.0
    %1426 = vmatpush1.msra.mxu0 %v1393
    %1427 = vmatprep.subr.mxu0 0.0
    %1428 = vmatpush1.msra.mxu0 %v1392
    %1429 = vmatprep.subr.mxu0 0.0
    %1430 = vmatpush1.msra.mxu0 %v1391
    %1431 = vmatprep.subr.mxu0 0.0
    %1432 = vmatpush1.msra.mxu0 %v1390
    %1433 = vmatprep.subr.mxu0 0.0
    %1434 = vmatpush1.msra.mxu0 %v1389
    %1435 = vmatprep.subr.mxu0 0.0
    %1436 = vmatpush1.msra.mxu0 %v1388
    %1437 = vmatprep.subr.mxu0 0.0
    %1438 = vmatpush1.msra.mxu0 %v1387
    %1439 = vmatprep.subr.mxu0 0.0
    %1440 = vmatpush1.msra.mxu0 %v1386
    %1441 = vmatprep.subr.mxu0 0.0
    %1442 = vmatpush2.msra.mxu0 0.0
    %1443 = vmatprep.subr.mxu0 0.0
    %1444 = vmatpush2.msra.mxu0 0.0
    %1445 = vmatprep.subr.mxu0 0.0
    %1446 = vmatpush2.msra.mxu0 0.0
    %1447 = vmatprep.subr.mxu0 0.0
    %1448 = vmatpush2.msra.mxu0 0.0
    %1449 = vmatprep.subr.mxu0 0.0
    %1450 = vmatpush2.msra.mxu0 0.0
    %1451 = vmatprep.subr.mxu0 0.0
    %1452 = vmatpush2.msra.mxu0 0.0
    %1453 = vmatprep.subr.mxu0 0.0
    %1454 = vmatpush2.msra.mxu0 0.0
    %1455 = vmatprep.subr.mxu0 0.0
    %1456 = vmatpush2.msra.mxu0 0.0
    %1457 = vmatprep.subr.mxu0 0.0
    %1458 = vmatpush2.msra.mxu0 0.0
    %1459 = vmatprep.subr.mxu0 0.0
    %1460 = vmatpush2.msra.mxu0 0.0
    %1461 = vmatprep.subr.mxu0 0.0
    %1462 = vmatpush2.msra.mxu0 0.0
    %1463 = vmatprep.subr.mxu0 0.0
    %1464 = vmatpush2.msra.mxu0 0.0
    %1465 = vmatprep.subr.mxu0 0.0
    %1466 = vmatpush2.msra.mxu0 0.0
    %1467 = vmatprep.subr.mxu0 0.0
    %1468 = vmatpush2.msra.mxu0 0.0
    %1469 = vmatprep.subr.mxu0 0.0
    %1470 = vmatpush2.msra.mxu0 0.0
    %1471 = vmatprep.subr.mxu0 0.0
    %1472 = vmatpush2.msra.mxu0 0.0
    %1473 = vmatprep.mubr.f32.mxu0 0.0
    %1474 = vmatmul.mubr.f32.gmra.mxu0 %v1258
    %v1475 = vpop.f32.mrf.mxu0
    %v1476 = vadd.f32 %v1407, %v1475
    %v1477 = vpop.f32.mrf.mxu0
    %1478 = vmatprep.mubr.f32.mxu0 0.0
    %1479 = vmatmul.mubr.f32.gmra.mxu0 %v1259
    %v1480 = vpop.f32.mrf.mxu0
    %v1481 = vadd.f32 %v1407, %v1480
    %v1482 = vpop.f32.mrf.mxu0
    %1483 = vmatprep.mubr.f32.mxu0 0.0
    %1484 = vmatmul.mubr.f32.gmra.mxu0 %v1260
    %v1485 = vpop.f32.mrf.mxu0
    %v1486 = vadd.f32 %v1407, %v1485
    %v1487 = vpop.f32.mrf.mxu0
    %1488 = vmatprep.mubr.f32.mxu0 0.0
    %1489 = vmatmul.mubr.f32.gmra.mxu0 %v1261
    %v1490 = vpop.f32.mrf.mxu0
    %v1491 = vadd.f32 %v1407, %v1490
    %v1492 = vpop.f32.mrf.mxu0
    %1493 = vmatprep.mubr.f32.mxu0 0.0
    %1494 = vmatmul.mubr.f32.gmra.mxu0 %v1262
    %v1495 = vpop.f32.mrf.mxu0
    %v1496 = vadd.f32 %v1407, %v1495
    %v1497 = vpop.f32.mrf.mxu0
    %1498 = vmatprep.mubr.f32.mxu0 0.0
    %1499 = vmatmul.mubr.f32.gmra.mxu0 %v1263
    %v1500 = vpop.f32.mrf.mxu0
    %v1501 = vadd.f32 %v1407, %v1500
    %v1502 = vpop.f32.mrf.mxu0
    %1503 = vmatprep.mubr.f32.mxu0 0.0
    %1504 = vmatmul.mubr.f32.gmra.mxu0 %v1264
    %v1505 = vpop.f32.mrf.mxu0
    %v1506 = vadd.f32 %v1407, %v1505
    %v1507 = vpop.f32.mrf.mxu0
    %1508 = vmatprep.mubr.f32.mxu0 0.0
    %1509 = vmatmul.mubr.f32.gmra.mxu0 %v1265
    %v1510 = vpop.f32.mrf.mxu0
    %v1511 = vadd.f32 %v1407, %v1510
    %v1512 = vpop.f32.mrf.mxu0
    %1513 = vmatprep.mubr.f32.mxu0 0.0
    %1514 = vmatmul.mubr.f32.gmra.mxu0 %v1266
    %v1515 = vpop.f32.mrf.mxu0
    %v1516 = vadd.f32 %v1407, %v1515
    %v1517 = vpop.f32.mrf.mxu0
    %1518 = vmatprep.mubr.f32.mxu0 0.0
    %1519 = vmatmul.mubr.f32.gmra.mxu0 %v1267
    %v1520 = vpop.f32.mrf.mxu0
    %v1521 = vadd.f32 %v1407, %v1520
    %v1522 = vpop.f32.mrf.mxu0
    %1523 = vmatprep.mubr.f32.mxu0 0.0
    %1524 = vmatmul.mubr.f32.gmra.mxu0 %v1268
    %v1525 = vpop.f32.mrf.mxu0
    %v1526 = vadd.f32 %v1407, %v1525
    %v1527 = vpop.f32.mrf.mxu0
    %1528 = vmatprep.mubr.f32.mxu0 0.0
    %1529 = vmatmul.mubr.f32.gmra.mxu0 %v1269
    %v1530 = vpop.f32.mrf.mxu0
    %v1531 = vadd.f32 %v1407, %v1530
    %v1532 = vpop.f32.mrf.mxu0
    %1533 = vmatprep.mubr.f32.mxu0 0.0
    %1534 = vmatmul.mubr.f32.gmra.mxu0 %v1270
    %v1535 = vpop.f32.mrf.mxu0
    %v1536 = vadd.f32 %v1407, %v1535
    %v1537 = vpop.f32.mrf.mxu0
    %1538 = vmatprep.mubr.f32.mxu0 0.0
    %1539 = vmatmul.mubr.f32.gmra.mxu0 %v1271
    %v1540 = vpop.f32.mrf.mxu0
    %v1541 = vadd.f32 %v1407, %v1540
    %v1542 = vpop.f32.mrf.mxu0
    %1543 = vmatprep.mubr.f32.mxu0 0.0
    %1544 = vmatmul.mubr.f32.gmra.mxu0 %v1272
    %v1545 = vpop.f32.mrf.mxu0
    %v1546 = vadd.f32 %v1407, %v1545
    %v1547 = vpop.f32.mrf.mxu0
    %1548 = vmatprep.mubr.f32.mxu0 0.0
    %1549 = vmatmul.mubr.f32.gmra.mxu0 %v1273
    %v1550 = vpop.f32.mrf.mxu0
    %v1551 = vadd.f32 %v1407, %v1550
    %v1552 = vpop.f32.mrf.mxu0
    %1553 = vmatprep.mubr.f32.mxu0 0.0
    %1554 = vmatmul.mubr.f32.gmra.mxu0 %v1274
    %v1555 = vpop.f32.mrf.mxu0
    %v1556 = vadd.f32 %v1407, %v1555
    %v1557 = vpop.f32.mrf.mxu0
    %1558 = vmatprep.mubr.f32.mxu0 0.0
    %1559 = vmatmul.mubr.f32.gmra.mxu0 %v1275
    %v1560 = vpop.f32.mrf.mxu0
    %v1561 = vadd.f32 %v1407, %v1560
    %v1562 = vpop.f32.mrf.mxu0
    %1563 = vmatprep.mubr.f32.mxu0 0.0
    %1564 = vmatmul.mubr.f32.gmra.mxu0 %v1276
    %v1565 = vpop.f32.mrf.mxu0
    %v1566 = vadd.f32 %v1407, %v1565
    %v1567 = vpop.f32.mrf.mxu0
    %1568 = vmatprep.mubr.f32.mxu0 0.0
    %1569 = vmatmul.mubr.f32.gmra.mxu0 %v1277
    %v1570 = vpop.f32.mrf.mxu0
    %v1571 = vadd.f32 %v1407, %v1570
    %v1572 = vpop.f32.mrf.mxu0
    %1573 = vmatprep.mubr.f32.mxu0 0.0
    %1574 = vmatmul.mubr.f32.gmra.mxu0 %v1278
    %v1575 = vpop.f32.mrf.mxu0
    %v1576 = vadd.f32 %v1407, %v1575
    %v1577 = vpop.f32.mrf.mxu0
    %1578 = vmatprep.mubr.f32.mxu0 0.0
    %1579 = vmatmul.mubr.f32.gmra.mxu0 %v1279
    %v1580 = vpop.f32.mrf.mxu0
    %v1581 = vadd.f32 %v1407, %v1580
    %v1582 = vpop.f32.mrf.mxu0
    %1583 = vmatprep.mubr.f32.mxu0 0.0
    %1584 = vmatmul.mubr.f32.gmra.mxu0 %v1280
    %v1585 = vpop.f32.mrf.mxu0
    %v1586 = vadd.f32 %v1407, %v1585
    %v1587 = vpop.f32.mrf.mxu0
    %1588 = vmatprep.mubr.f32.mxu0 0.0
    %1589 = vmatmul.mubr.f32.gmra.mxu0 %v1281
    %v1590 = vpop.f32.mrf.mxu0
    %v1591 = vadd.f32 %v1407, %v1590
    %v1592 = vpop.f32.mrf.mxu0
    %1593 = vmatprep.mubr.f32.mxu0 0.0
    %1594 = vmatmul.mubr.f32.gmra.mxu0 %v1282
    %v1595 = vpop.f32.mrf.mxu0
    %v1596 = vadd.f32 %v1407, %v1595
    %v1597 = vpop.f32.mrf.mxu0
    %1598 = vmatprep.mubr.f32.mxu0 0.0
    %1599 = vmatmul.mubr.f32.gmra.mxu0 %v1283
    %v1600 = vpop.f32.mrf.mxu0
    %v1601 = vadd.f32 %v1407, %v1600
    %v1602 = vpop.f32.mrf.mxu0
    %1603 = vmatprep.mubr.f32.mxu0 0.0
    %1604 = vmatmul.mubr.f32.gmra.mxu0 %v1284
    %v1605 = vpop.f32.mrf.mxu0
    %v1606 = vadd.f32 %v1407, %v1605
    %v1607 = vpop.f32.mrf.mxu0
    %1608 = vmatprep.mubr.f32.mxu0 0.0
    %1609 = vmatmul.mubr.f32.gmra.mxu0 %v1285
    %v1610 = vpop.f32.mrf.mxu0
    %v1611 = vadd.f32 %v1407, %v1610
    %v1612 = vpop.f32.mrf.mxu0
    %1613 = vmatprep.mubr.f32.mxu0 0.0
    %1614 = vmatmul.mubr.f32.gmra.mxu0 %v1286
    %v1615 = vpop.f32.mrf.mxu0
    %v1616 = vadd.f32 %v1407, %v1615
    %v1617 = vpop.f32.mrf.mxu0
    %1618 = vmatprep.mubr.f32.mxu0 0.0
    %1619 = vmatmul.mubr.f32.gmra.mxu0 %v1287
    %v1620 = vpop.f32.mrf.mxu0
    %v1621 = vadd.f32 %v1407, %v1620
    %v1622 = vpop.f32.mrf.mxu0
    %1623 = vmatprep.mubr.f32.mxu0 0.0
    %1624 = vmatmul.mubr.f32.gmra.mxu0 %v1288
    %v1625 = vpop.f32.mrf.mxu0
    %v1626 = vadd.f32 %v1407, %v1625
    %v1627 = vpop.f32.mrf.mxu0
    %1628 = vmatprep.mubr.f32.mxu0 0.0
    %1629 = vmatmul.mubr.f32.gmra.mxu0 %v1289
    %v1630 = vpop.f32.mrf.mxu0
    %v1631 = vadd.f32 %v1407, %v1630
    %v1632 = vpop.f32.mrf.mxu0
    %1633 = vmatprep.mubr.f32.mxu0 0.0
    %1634 = vmatmul.mubr.f32.gmra.mxu0 %v1290
    %v1635 = vpop.f32.mrf.mxu0
    %v1636 = vadd.f32 %v1407, %v1635
    %v1637 = vpop.f32.mrf.mxu0
    %1638 = vmatprep.mubr.f32.mxu0 0.0
    %1639 = vmatmul.mubr.f32.gmra.mxu0 %v1291
    %v1640 = vpop.f32.mrf.mxu0
    %v1641 = vadd.f32 %v1407, %v1640
    %v1642 = vpop.f32.mrf.mxu0
    %1643 = vmatprep.mubr.f32.mxu0 0.0
    %1644 = vmatmul.mubr.f32.gmra.mxu0 %v1292
    %v1645 = vpop.f32.mrf.mxu0
    %v1646 = vadd.f32 %v1407, %v1645
    %v1647 = vpop.f32.mrf.mxu0
    %1648 = vmatprep.mubr.f32.mxu0 0.0
    %1649 = vmatmul.mubr.f32.gmra.mxu0 %v1293
    %v1650 = vpop.f32.mrf.mxu0
    %v1651 = vadd.f32 %v1407, %v1650
    %v1652 = vpop.f32.mrf.mxu0
    %1653 = vmatprep.mubr.f32.mxu0 0.0
    %1654 = vmatmul.mubr.f32.gmra.mxu0 %v1294
    %v1655 = vpop.f32.mrf.mxu0
    %v1656 = vadd.f32 %v1407, %v1655
    %v1657 = vpop.f32.mrf.mxu0
    %1658 = vmatprep.mubr.f32.mxu0 0.0
    %1659 = vmatmul.mubr.f32.gmra.mxu0 %v1295
    %v1660 = vpop.f32.mrf.mxu0
    %v1661 = vadd.f32 %v1407, %v1660
    %v1662 = vpop.f32.mrf.mxu0
    %1663 = vmatprep.mubr.f32.mxu0 0.0
    %1664 = vmatmul.mubr.f32.gmra.mxu0 %v1296
    %v1665 = vpop.f32.mrf.mxu0
    %v1666 = vadd.f32 %v1407, %v1665
    %v1667 = vpop.f32.mrf.mxu0
    %1668 = vmatprep.mubr.f32.mxu0 0.0
    %1669 = vmatmul.mubr.f32.gmra.mxu0 %v1297
    %v1670 = vpop.f32.mrf.mxu0
    %v1671 = vadd.f32 %v1407, %v1670
    %v1672 = vpop.f32.mrf.mxu0
    %1673 = vmatprep.mubr.f32.mxu0 0.0
    %1674 = vmatmul.mubr.f32.gmra.mxu0 %v1298
    %v1675 = vpop.f32.mrf.mxu0
    %v1676 = vadd.f32 %v1407, %v1675
    %v1677 = vpop.f32.mrf.mxu0
    %1678 = vmatprep.mubr.f32.mxu0 0.0
    %1679 = vmatmul.mubr.f32.gmra.mxu0 %v1299
    %v1680 = vpop.f32.mrf.mxu0
    %v1681 = vadd.f32 %v1407, %v1680
    %v1682 = vpop.f32.mrf.mxu0
    %1683 = vmatprep.mubr.f32.mxu0 0.0
    %1684 = vmatmul.mubr.f32.gmra.mxu0 %v1300
    %v1685 = vpop.f32.mrf.mxu0
    %v1686 = vadd.f32 %v1407, %v1685
    %v1687 = vpop.f32.mrf.mxu0
    %1688 = vmatprep.mubr.f32.mxu0 0.0
    %1689 = vmatmul.mubr.f32.gmra.mxu0 %v1301
    %v1690 = vpop.f32.mrf.mxu0
    %v1691 = vadd.f32 %v1407, %v1690
    %v1692 = vpop.f32.mrf.mxu0
    %1693 = vmatprep.mubr.f32.mxu0 0.0
    %1694 = vmatmul.mubr.f32.gmra.mxu0 %v1302
    %v1695 = vpop.f32.mrf.mxu0
    %v1696 = vadd.f32 %v1407, %v1695
    %v1697 = vpop.f32.mrf.mxu0
    %1698 = vmatprep.mubr.f32.mxu0 0.0
    %1699 = vmatmul.mubr.f32.gmra.mxu0 %v1303
    %v1700 = vpop.f32.mrf.mxu0
    %v1701 = vadd.f32 %v1407, %v1700
    %v1702 = vpop.f32.mrf.mxu0
    %1703 = vmatprep.mubr.f32.mxu0 0.0
    %1704 = vmatmul.mubr.f32.gmra.mxu0 %v1304
    %v1705 = vpop.f32.mrf.mxu0
    %v1706 = vadd.f32 %v1407, %v1705
    %v1707 = vpop.f32.mrf.mxu0
    %1708 = vmatprep.mubr.f32.mxu0 0.0
    %1709 = vmatmul.mubr.f32.gmra.mxu0 %v1305
    %v1710 = vpop.f32.mrf.mxu0
    %v1711 = vadd.f32 %v1407, %v1710
    %v1712 = vpop.f32.mrf.mxu0
    %1713 = vmatprep.mubr.f32.mxu0 0.0
    %1714 = vmatmul.mubr.f32.gmra.mxu0 %v1306
    %v1715 = vpop.f32.mrf.mxu0
    %v1716 = vadd.f32 %v1407, %v1715
    %v1717 = vpop.f32.mrf.mxu0
    %1718 = vmatprep.mubr.f32.mxu0 0.0
    %1719 = vmatmul.mubr.f32.gmra.mxu0 %v1307
    %v1720 = vpop.f32.mrf.mxu0
    %v1721 = vadd.f32 %v1407, %v1720
    %v1722 = vpop.f32.mrf.mxu0
    %1723 = vmatprep.mubr.f32.mxu0 0.0
    %1724 = vmatmul.mubr.f32.gmra.mxu0 %v1308
    %v1725 = vpop.f32.mrf.mxu0
    %v1726 = vadd.f32 %v1407, %v1725
    %v1727 = vpop.f32.mrf.mxu0
    %1728 = vmatprep.mubr.f32.mxu0 0.0
    %1729 = vmatmul.mubr.f32.gmra.mxu0 %v1309
    %v1730 = vpop.f32.mrf.mxu0
    %v1731 = vadd.f32 %v1407, %v1730
    %v1732 = vpop.f32.mrf.mxu0
    %1733 = vmatprep.mubr.f32.mxu0 0.0
    %1734 = vmatmul.mubr.f32.gmra.mxu0 %v1310
    %v1735 = vpop.f32.mrf.mxu0
    %v1736 = vadd.f32 %v1407, %v1735
    %v1737 = vpop.f32.mrf.mxu0
    %1738 = vmatprep.mubr.f32.mxu0 0.0
    %1739 = vmatmul.mubr.f32.gmra.mxu0 %v1311
    %v1740 = vpop.f32.mrf.mxu0
    %v1741 = vadd.f32 %v1407, %v1740
    %v1742 = vpop.f32.mrf.mxu0
    %1743 = vmatprep.mubr.f32.mxu0 0.0
    %1744 = vmatmul.mubr.f32.gmra.mxu0 %v1312
    %v1745 = vpop.f32.mrf.mxu0
    %v1746 = vadd.f32 %v1407, %v1745
    %v1747 = vpop.f32.mrf.mxu0
    %1748 = vmatprep.mubr.f32.mxu0 0.0
    %1749 = vmatmul.mubr.f32.gmra.mxu0 %v1313
    %v1750 = vpop.f32.mrf.mxu0
    %v1751 = vadd.f32 %v1407, %v1750
    %v1752 = vpop.f32.mrf.mxu0
    %1753 = vmatprep.mubr.f32.mxu0 0.0
    %1754 = vmatmul.mubr.f32.gmra.mxu0 %v1314
    %v1755 = vpop.f32.mrf.mxu0
    %v1756 = vadd.f32 %v1407, %v1755
    %v1757 = vpop.f32.mrf.mxu0
    %1758 = vmatprep.mubr.f32.mxu0 0.0
    %1759 = vmatmul.mubr.f32.gmra.mxu0 %v1315
    %v1760 = vpop.f32.mrf.mxu0
    %v1761 = vadd.f32 %v1407, %v1760
    %v1762 = vpop.f32.mrf.mxu0
    %1763 = vmatprep.mubr.f32.mxu0 0.0
    %1764 = vmatmul.mubr.f32.gmra.mxu0 %v1316
    %v1765 = vpop.f32.mrf.mxu0
    %v1766 = vadd.f32 %v1407, %v1765
    %v1767 = vpop.f32.mrf.mxu0
    %1768 = vmatprep.mubr.f32.mxu0 0.0
    %1769 = vmatmul.mubr.f32.gmra.mxu0 %v1317
    %v1770 = vpop.f32.mrf.mxu0
    %v1771 = vadd.f32 %v1407, %v1770
    %v1772 = vpop.f32.mrf.mxu0
    %1773 = vmatprep.mubr.f32.mxu0 0.0
    %1774 = vmatmul.mubr.f32.gmra.mxu0 %v1318
    %v1775 = vpop.f32.mrf.mxu0
    %v1776 = vadd.f32 %v1407, %v1775
    %v1777 = vpop.f32.mrf.mxu0
    %1778 = vmatprep.mubr.f32.mxu0 0.0
    %1779 = vmatmul.mubr.f32.gmra.mxu0 %v1319
    %v1780 = vpop.f32.mrf.mxu0
    %v1781 = vadd.f32 %v1407, %v1780
    %v1782 = vpop.f32.mrf.mxu0
    %1783 = vmatprep.mubr.f32.mxu0 0.0
    %1784 = vmatmul.mubr.f32.gmra.mxu0 %v1320
    %v1785 = vpop.f32.mrf.mxu0
    %v1786 = vadd.f32 %v1407, %v1785
    %v1787 = vpop.f32.mrf.mxu0
    %1788 = vmatprep.mubr.f32.mxu0 0.0
    %1789 = vmatmul.mubr.f32.gmra.mxu0 %v1321
    %v1790 = vpop.f32.mrf.mxu0
    %v1791 = vadd.f32 %v1407, %v1790
    %v1792 = vpop.f32.mrf.mxu0
    %1793 = vmatprep.mubr.f32.mxu0 0.0
    %1794 = vmatmul.mubr.f32.gmra.mxu0 %v1322
    %v1795 = vpop.f32.mrf.mxu0
    %v1796 = vadd.f32 %v1407, %v1795
    %v1797 = vpop.f32.mrf.mxu0
    %1798 = vmatprep.mubr.f32.mxu0 0.0
    %1799 = vmatmul.mubr.f32.gmra.mxu0 %v1323
    %v1800 = vpop.f32.mrf.mxu0
    %v1801 = vadd.f32 %v1407, %v1800
    %v1802 = vpop.f32.mrf.mxu0
    %1803 = vmatprep.mubr.f32.mxu0 0.0
    %1804 = vmatmul.mubr.f32.gmra.mxu0 %v1324
    %v1805 = vpop.f32.mrf.mxu0
    %v1806 = vadd.f32 %v1407, %v1805
    %v1807 = vpop.f32.mrf.mxu0
    %1808 = vmatprep.mubr.f32.mxu0 0.0
    %1809 = vmatmul.mubr.f32.gmra.mxu0 %v1325
    %v1810 = vpop.f32.mrf.mxu0
    %v1811 = vadd.f32 %v1407, %v1810
    %v1812 = vpop.f32.mrf.mxu0
    %1813 = vmatprep.mubr.f32.mxu0 0.0
    %1814 = vmatmul.mubr.f32.gmra.mxu0 %v1326
    %v1815 = vpop.f32.mrf.mxu0
    %v1816 = vadd.f32 %v1407, %v1815
    %v1817 = vpop.f32.mrf.mxu0
    %1818 = vmatprep.mubr.f32.mxu0 0.0
    %1819 = vmatmul.mubr.f32.gmra.mxu0 %v1327
    %v1820 = vpop.f32.mrf.mxu0
    %v1821 = vadd.f32 %v1407, %v1820
    %v1822 = vpop.f32.mrf.mxu0
    %1823 = vmatprep.mubr.f32.mxu0 0.0
    %1824 = vmatmul.mubr.f32.gmra.mxu0 %v1328
    %v1825 = vpop.f32.mrf.mxu0
    %v1826 = vadd.f32 %v1407, %v1825
    %v1827 = vpop.f32.mrf.mxu0
    %1828 = vmatprep.mubr.f32.mxu0 0.0
    %1829 = vmatmul.mubr.f32.gmra.mxu0 %v1329
    %v1830 = vpop.f32.mrf.mxu0
    %v1831 = vadd.f32 %v1407, %v1830
    %v1832 = vpop.f32.mrf.mxu0
    %1833 = vmatprep.mubr.f32.mxu0 0.0
    %1834 = vmatmul.mubr.f32.gmra.mxu0 %v1330
    %v1835 = vpop.f32.mrf.mxu0
    %v1836 = vadd.f32 %v1407, %v1835
    %v1837 = vpop.f32.mrf.mxu0
    %1838 = vmatprep.mubr.f32.mxu0 0.0
    %1839 = vmatmul.mubr.f32.gmra.mxu0 %v1331
    %v1840 = vpop.f32.mrf.mxu0
    %v1841 = vadd.f32 %v1407, %v1840
    %v1842 = vpop.f32.mrf.mxu0
    %1843 = vmatprep.mubr.f32.mxu0 0.0
    %1844 = vmatmul.mubr.f32.gmra.mxu0 %v1332
    %v1845 = vpop.f32.mrf.mxu0
    %v1846 = vadd.f32 %v1407, %v1845
    %v1847 = vpop.f32.mrf.mxu0
    %1848 = vmatprep.mubr.f32.mxu0 0.0
    %1849 = vmatmul.mubr.f32.gmra.mxu0 %v1333
    %v1850 = vpop.f32.mrf.mxu0
    %v1851 = vadd.f32 %v1407, %v1850
    %v1852 = vpop.f32.mrf.mxu0
    %1853 = vmatprep.mubr.f32.mxu0 0.0
    %1854 = vmatmul.mubr.f32.gmra.mxu0 %v1334
    %v1855 = vpop.f32.mrf.mxu0
    %v1856 = vadd.f32 %v1407, %v1855
    %v1857 = vpop.f32.mrf.mxu0
    %1858 = vmatprep.mubr.f32.mxu0 0.0
    %1859 = vmatmul.mubr.f32.gmra.mxu0 %v1335
    %v1860 = vpop.f32.mrf.mxu0
    %v1861 = vadd.f32 %v1407, %v1860
    %v1862 = vpop.f32.mrf.mxu0
    %1863 = vmatprep.mubr.f32.mxu0 0.0
    %1864 = vmatmul.mubr.f32.gmra.mxu0 %v1336
    %v1865 = vpop.f32.mrf.mxu0
    %v1866 = vadd.f32 %v1407, %v1865
    %v1867 = vpop.f32.mrf.mxu0
    %1868 = vmatprep.mubr.f32.mxu0 0.0
    %1869 = vmatmul.mubr.f32.gmra.mxu0 %v1337
    %v1870 = vpop.f32.mrf.mxu0
    %v1871 = vadd.f32 %v1407, %v1870
    %v1872 = vpop.f32.mrf.mxu0
    %1873 = vmatprep.mubr.f32.mxu0 0.0
    %1874 = vmatmul.mubr.f32.gmra.mxu0 %v1338
    %v1875 = vpop.f32.mrf.mxu0
    %v1876 = vadd.f32 %v1407, %v1875
    %v1877 = vpop.f32.mrf.mxu0
    %1878 = vmatprep.mubr.f32.mxu0 0.0
    %1879 = vmatmul.mubr.f32.gmra.mxu0 %v1339
    %v1880 = vpop.f32.mrf.mxu0
    %v1881 = vadd.f32 %v1407, %v1880
    %v1882 = vpop.f32.mrf.mxu0
    %1883 = vmatprep.mubr.f32.mxu0 0.0
    %1884 = vmatmul.mubr.f32.gmra.mxu0 %v1340
    %v1885 = vpop.f32.mrf.mxu0
    %v1886 = vadd.f32 %v1407, %v1885
    %v1887 = vpop.f32.mrf.mxu0
    %1888 = vmatprep.mubr.f32.mxu0 0.0
    %1889 = vmatmul.mubr.f32.gmra.mxu0 %v1341
    %v1890 = vpop.f32.mrf.mxu0
    %v1891 = vadd.f32 %v1407, %v1890
    %v1892 = vpop.f32.mrf.mxu0
    %1893 = vmatprep.mubr.f32.mxu0 0.0
    %1894 = vmatmul.mubr.f32.gmra.mxu0 %v1342
    %v1895 = vpop.f32.mrf.mxu0
    %v1896 = vadd.f32 %v1407, %v1895
    %v1897 = vpop.f32.mrf.mxu0
    %1898 = vmatprep.mubr.f32.mxu0 0.0
    %1899 = vmatmul.mubr.f32.gmra.mxu0 %v1343
    %v1900 = vpop.f32.mrf.mxu0
    %v1901 = vadd.f32 %v1407, %v1900
    %v1902 = vpop.f32.mrf.mxu0
    %1903 = vmatprep.mubr.f32.mxu0 0.0
    %1904 = vmatmul.mubr.f32.gmra.mxu0 %v1344
    %v1905 = vpop.f32.mrf.mxu0
    %v1906 = vadd.f32 %v1407, %v1905
    %v1907 = vpop.f32.mrf.mxu0
    %1908 = vmatprep.mubr.f32.mxu0 0.0
    %1909 = vmatmul.mubr.f32.gmra.mxu0 %v1345
    %v1910 = vpop.f32.mrf.mxu0
    %v1911 = vadd.f32 %v1407, %v1910
    %v1912 = vpop.f32.mrf.mxu0
    %1913 = vmatprep.mubr.f32.mxu0 0.0
    %1914 = vmatmul.mubr.f32.gmra.mxu0 %v1346
    %v1915 = vpop.f32.mrf.mxu0
    %v1916 = vadd.f32 %v1407, %v1915
    %v1917 = vpop.f32.mrf.mxu0
    %1918 = vmatprep.mubr.f32.mxu0 0.0
    %1919 = vmatmul.mubr.f32.gmra.mxu0 %v1347
    %v1920 = vpop.f32.mrf.mxu0
    %v1921 = vadd.f32 %v1407, %v1920
    %v1922 = vpop.f32.mrf.mxu0
    %1923 = vmatprep.mubr.f32.mxu0 0.0
    %1924 = vmatmul.mubr.f32.gmra.mxu0 %v1348
    %v1925 = vpop.f32.mrf.mxu0
    %v1926 = vadd.f32 %v1407, %v1925
    %v1927 = vpop.f32.mrf.mxu0
    %1928 = vmatprep.mubr.f32.mxu0 0.0
    %1929 = vmatmul.mubr.f32.gmra.mxu0 %v1349
    %v1930 = vpop.f32.mrf.mxu0
    %v1931 = vadd.f32 %v1407, %v1930
    %v1932 = vpop.f32.mrf.mxu0
    %1933 = vmatprep.mubr.f32.mxu0 0.0
    %1934 = vmatmul.mubr.f32.gmra.mxu0 %v1350
    %v1935 = vpop.f32.mrf.mxu0
    %v1936 = vadd.f32 %v1407, %v1935
    %v1937 = vpop.f32.mrf.mxu0
    %1938 = vmatprep.mubr.f32.mxu0 0.0
    %1939 = vmatmul.mubr.f32.gmra.mxu0 %v1351
    %v1940 = vpop.f32.mrf.mxu0
    %v1941 = vadd.f32 %v1407, %v1940
    %v1942 = vpop.f32.mrf.mxu0
    %1943 = vmatprep.mubr.f32.mxu0 0.0
    %1944 = vmatmul.mubr.f32.gmra.mxu0 %v1352
    %v1945 = vpop.f32.mrf.mxu0
    %v1946 = vadd.f32 %v1407, %v1945
    %v1947 = vpop.f32.mrf.mxu0
    %1948 = vmatprep.mubr.f32.mxu0 0.0
    %1949 = vmatmul.mubr.f32.gmra.mxu0 %v1353
    %v1950 = vpop.f32.mrf.mxu0
    %v1951 = vadd.f32 %v1407, %v1950
    %v1952 = vpop.f32.mrf.mxu0
    %1953 = vmatprep.mubr.f32.mxu0 0.0
    %1954 = vmatmul.mubr.f32.gmra.mxu0 %v1354
    %v1955 = vpop.f32.mrf.mxu0
    %v1956 = vadd.f32 %v1407, %v1955
    %v1957 = vpop.f32.mrf.mxu0
    %1958 = vmatprep.mubr.f32.mxu0 0.0
    %1959 = vmatmul.mubr.f32.gmra.mxu0 %v1355
    %v1960 = vpop.f32.mrf.mxu0
    %v1961 = vadd.f32 %v1407, %v1960
    %v1962 = vpop.f32.mrf.mxu0
    %1963 = vmatprep.mubr.f32.mxu0 0.0
    %1964 = vmatmul.mubr.f32.gmra.mxu0 %v1356
    %v1965 = vpop.f32.mrf.mxu0
    %v1966 = vadd.f32 %v1407, %v1965
    %v1967 = vpop.f32.mrf.mxu0
    %1968 = vmatprep.mubr.f32.mxu0 0.0
    %1969 = vmatmul.mubr.f32.gmra.mxu0 %v1357
    %v1970 = vpop.f32.mrf.mxu0
    %v1971 = vadd.f32 %v1407, %v1970
    %v1972 = vpop.f32.mrf.mxu0
    %1973 = vmatprep.mubr.f32.mxu0 0.0
    %1974 = vmatmul.mubr.f32.gmra.mxu0 %v1358
    %v1975 = vpop.f32.mrf.mxu0
    %v1976 = vadd.f32 %v1407, %v1975
    %v1977 = vpop.f32.mrf.mxu0
    %1978 = vmatprep.mubr.f32.mxu0 0.0
    %1979 = vmatmul.mubr.f32.gmra.mxu0 %v1359
    %v1980 = vpop.f32.mrf.mxu0
    %v1981 = vadd.f32 %v1407, %v1980
    %v1982 = vpop.f32.mrf.mxu0
    %1983 = vmatprep.mubr.f32.mxu0 0.0
    %1984 = vmatmul.mubr.f32.gmra.mxu0 %v1360
    %v1985 = vpop.f32.mrf.mxu0
    %v1986 = vadd.f32 %v1407, %v1985
    %v1987 = vpop.f32.mrf.mxu0
    %1988 = vmatprep.mubr.f32.mxu0 0.0
    %1989 = vmatmul.mubr.f32.gmra.mxu0 %v1361
    %v1990 = vpop.f32.mrf.mxu0
    %v1991 = vadd.f32 %v1407, %v1990
    %v1992 = vpop.f32.mrf.mxu0
    %1993 = vmatprep.mubr.f32.mxu0 0.0
    %1994 = vmatmul.mubr.f32.gmra.mxu0 %v1362
    %v1995 = vpop.f32.mrf.mxu0
    %v1996 = vadd.f32 %v1407, %v1995
    %v1997 = vpop.f32.mrf.mxu0
    %1998 = vmatprep.mubr.f32.mxu0 0.0
    %1999 = vmatmul.mubr.f32.gmra.mxu0 %v1363
    %v2000 = vpop.f32.mrf.mxu0
    %v2001 = vadd.f32 %v1407, %v2000
    %v2002 = vpop.f32.mrf.mxu0
    %2003 = vmatprep.mubr.f32.mxu0 0.0
    %2004 = vmatmul.mubr.f32.gmra.mxu0 %v1364
    %v2005 = vpop.f32.mrf.mxu0
    %v2006 = vadd.f32 %v1407, %v2005
    %v2007 = vpop.f32.mrf.mxu0
    %2008 = vmatprep.mubr.f32.mxu0 0.0
    %2009 = vmatmul.mubr.f32.gmra.mxu0 %v1365
    %v2010 = vpop.f32.mrf.mxu0
    %v2011 = vadd.f32 %v1407, %v2010
    %v2012 = vpop.f32.mrf.mxu0
    %2013 = vmatprep.mubr.f32.mxu0 0.0
    %2014 = vmatmul.mubr.f32.gmra.mxu0 %v1366
    %v2015 = vpop.f32.mrf.mxu0
    %v2016 = vadd.f32 %v1407, %v2015
    %v2017 = vpop.f32.mrf.mxu0
    %2018 = vmatprep.mubr.f32.mxu0 0.0
    %2019 = vmatmul.mubr.f32.gmra.mxu0 %v1367
    %v2020 = vpop.f32.mrf.mxu0
    %v2021 = vadd.f32 %v1407, %v2020
    %v2022 = vpop.f32.mrf.mxu0
    %2023 = vmatprep.mubr.f32.mxu0 0.0
    %2024 = vmatmul.mubr.f32.gmra.mxu0 %v1368
    %v2025 = vpop.f32.mrf.mxu0
    %v2026 = vadd.f32 %v1407, %v2025
    %v2027 = vpop.f32.mrf.mxu0
    %2028 = vmatprep.mubr.f32.mxu0 0.0
    %2029 = vmatmul.mubr.f32.gmra.mxu0 %v1369
    %v2030 = vpop.f32.mrf.mxu0
    %v2031 = vadd.f32 %v1407, %v2030
    %v2032 = vpop.f32.mrf.mxu0
    %2033 = vmatprep.mubr.f32.mxu0 0.0
    %2034 = vmatmul.mubr.f32.gmra.mxu0 %v1370
    %v2035 = vpop.f32.mrf.mxu0
    %v2036 = vadd.f32 %v1407, %v2035
    %v2037 = vpop.f32.mrf.mxu0
    %2038 = vmatprep.mubr.f32.mxu0 0.0
    %2039 = vmatmul.mubr.f32.gmra.mxu0 %v1371
    %v2040 = vpop.f32.mrf.mxu0
    %v2041 = vadd.f32 %v1407, %v2040
    %v2042 = vpop.f32.mrf.mxu0
    %2043 = vmatprep.mubr.f32.mxu0 0.0
    %2044 = vmatmul.mubr.f32.gmra.mxu0 %v1372
    %v2045 = vpop.f32.mrf.mxu0
    %v2046 = vadd.f32 %v1407, %v2045
    %v2047 = vpop.f32.mrf.mxu0
    %2048 = vmatprep.mubr.f32.mxu0 0.0
    %2049 = vmatmul.mubr.f32.gmra.mxu0 %v1373
    %v2050 = vpop.f32.mrf.mxu0
    %v2051 = vadd.f32 %v1407, %v2050
    %v2052 = vpop.f32.mrf.mxu0
    %2053 = vmatprep.mubr.f32.mxu0 0.0
    %2054 = vmatmul.mubr.f32.gmra.mxu0 %v1374
    %v2055 = vpop.f32.mrf.mxu0
    %v2056 = vadd.f32 %v1407, %v2055
    %v2057 = vpop.f32.mrf.mxu0
    %2058 = vmatprep.mubr.f32.mxu0 0.0
    %2059 = vmatmul.mubr.f32.gmra.mxu0 %v1375
    %v2060 = vpop.f32.mrf.mxu0
    %v2061 = vadd.f32 %v1407, %v2060
    %v2062 = vpop.f32.mrf.mxu0
    %2063 = vmatprep.mubr.f32.mxu0 0.0
    %2064 = vmatmul.mubr.f32.gmra.mxu0 %v1376
    %v2065 = vpop.f32.mrf.mxu0
    %v2066 = vadd.f32 %v1407, %v2065
    %v2067 = vpop.f32.mrf.mxu0
    %2068 = vmatprep.mubr.f32.mxu0 0.0
    %2069 = vmatmul.mubr.f32.gmra.mxu0 %v1377
    %v2070 = vpop.f32.mrf.mxu0
    %v2071 = vadd.f32 %v1407, %v2070
    %v2072 = vpop.f32.mrf.mxu0
    %2073 = vmatprep.mubr.f32.mxu0 0.0
    %2074 = vmatmul.mubr.f32.gmra.mxu0 %v1378
    %v2075 = vpop.f32.mrf.mxu0
    %v2076 = vadd.f32 %v1407, %v2075
    %v2077 = vpop.f32.mrf.mxu0
    %2078 = vmatprep.mubr.f32.mxu0 0.0
    %2079 = vmatmul.mubr.f32.gmra.mxu0 %v1379
    %v2080 = vpop.f32.mrf.mxu0
    %v2081 = vadd.f32 %v1407, %v2080
    %v2082 = vpop.f32.mrf.mxu0
    %2083 = vmatprep.mubr.f32.mxu0 0.0
    %2084 = vmatmul.mubr.f32.gmra.mxu0 %v1380
    %v2085 = vpop.f32.mrf.mxu0
    %v2086 = vadd.f32 %v1407, %v2085
    %v2087 = vpop.f32.mrf.mxu0
    %2088 = vmatprep.mubr.f32.mxu0 0.0
    %2089 = vmatmul.mubr.f32.gmra.mxu0 %v1381
    %v2090 = vpop.f32.mrf.mxu0
    %v2091 = vadd.f32 %v1407, %v2090
    %v2092 = vpop.f32.mrf.mxu0
    %2093 = vmatprep.mubr.f32.mxu0 0.0
    %2094 = vmatmul.mubr.f32.gmra.mxu0 %v1382
    %v2095 = vpop.f32.mrf.mxu0
    %v2096 = vadd.f32 %v1407, %v2095
    %v2097 = vpop.f32.mrf.mxu0
    %2098 = vmatprep.mubr.f32.mxu0 0.0
    %2099 = vmatmul.mubr.f32.gmra.mxu0 %v1383
    %v2100 = vpop.f32.mrf.mxu0
    %v2101 = vadd.f32 %v1407, %v2100
    %v2102 = vpop.f32.mrf.mxu0
    %2103 = vmatprep.mubr.f32.mxu0 0.0
    %2104 = vmatmul.mubr.f32.gmra.mxu0 %v1384
    %v2105 = vpop.f32.mrf.mxu0
    %v2106 = vadd.f32 %v1407, %v2105
    %v2107 = vpop.f32.mrf.mxu0
    %2108 = vmatprep.mubr.f32.mxu0 0.0
    %2109 = vmatmul.mubr.f32.gmra.mxu0 %v1385
    %v2110 = vpop.f32.mrf.mxu0
    %v2111 = vadd.f32 %v1407, %v2110
    %v2112 = vpop.f32.mrf.mxu0
    %2113 = vdwg.mxu0
    %v2114 = vmax.f32 %v1476, 0.0
    %v2115 = vmax.f32 %v1481, 0.0
    %v2116 = vmax.f32 %v1486, 0.0
    %v2117 = vmax.f32 %v1491, 0.0
    %v2118 = vmax.f32 %v1496, 0.0
    %v2119 = vmax.f32 %v1501, 0.0
    %v2120 = vmax.f32 %v1506, 0.0
    %v2121 = vmax.f32 %v1511, 0.0
    %v2122 = vmax.f32 %v1516, 0.0
    %v2123 = vmax.f32 %v1521, 0.0
    %v2124 = vmax.f32 %v1526, 0.0
    %v2125 = vmax.f32 %v1531, 0.0
    %v2126 = vmax.f32 %v1536, 0.0
    %v2127 = vmax.f32 %v1541, 0.0
    %v2128 = vmax.f32 %v1546, 0.0
    %v2129 = vmax.f32 %v1551, 0.0
    %v2130 = vmax.f32 %v1556, 0.0
    %v2131 = vmax.f32 %v1561, 0.0
    %v2132 = vmax.f32 %v1566, 0.0
    %v2133 = vmax.f32 %v1571, 0.0
    %v2134 = vmax.f32 %v1576, 0.0
    %v2135 = vmax.f32 %v1581, 0.0
    %v2136 = vmax.f32 %v1586, 0.0
    %v2137 = vmax.f32 %v1591, 0.0
    %v2138 = vmax.f32 %v1596, 0.0
    %v2139 = vmax.f32 %v1601, 0.0
    %v2140 = vmax.f32 %v1606, 0.0
    %v2141 = vmax.f32 %v1611, 0.0
    %v2142 = vmax.f32 %v1616, 0.0
    %v2143 = vmax.f32 %v1621, 0.0
    %v2144 = vmax.f32 %v1626, 0.0
    %v2145 = vmax.f32 %v1631, 0.0
    %v2146 = vmax.f32 %v1636, 0.0
    %v2147 = vmax.f32 %v1641, 0.0
    %v2148 = vmax.f32 %v1646, 0.0
    %v2149 = vmax.f32 %v1651, 0.0
    %v2150 = vmax.f32 %v1656, 0.0
    %v2151 = vmax.f32 %v1661, 0.0
    %v2152 = vmax.f32 %v1666, 0.0
    %v2153 = vmax.f32 %v1671, 0.0
    %v2154 = vmax.f32 %v1676, 0.0
    %v2155 = vmax.f32 %v1681, 0.0
    %v2156 = vmax.f32 %v1686, 0.0
    %v2157 = vmax.f32 %v1691, 0.0
    %v2158 = vmax.f32 %v1696, 0.0
    %v2159 = vmax.f32 %v1701, 0.0
    %v2160 = vmax.f32 %v1706, 0.0
    %v2161 = vmax.f32 %v1711, 0.0
    %v2162 = vmax.f32 %v1716, 0.0
    %v2163 = vmax.f32 %v1721, 0.0
    %v2164 = vmax.f32 %v1726, 0.0
    %v2165 = vmax.f32 %v1731, 0.0
    %v2166 = vmax.f32 %v1736, 0.0
    %v2167 = vmax.f32 %v1741, 0.0
    %v2168 = vmax.f32 %v1746, 0.0
    %v2169 = vmax.f32 %v1751, 0.0
    %v2170 = vmax.f32 %v1756, 0.0
    %v2171 = vmax.f32 %v1761, 0.0
    %v2172 = vmax.f32 %v1766, 0.0
    %v2173 = vmax.f32 %v1771, 0.0
    %v2174 = vmax.f32 %v1776, 0.0
    %v2175 = vmax.f32 %v1781, 0.0
    %v2176 = vmax.f32 %v1786, 0.0
    %v2177 = vmax.f32 %v1791, 0.0
    %v2178 = vmax.f32 %v1796, 0.0
    %v2179 = vmax.f32 %v1801, 0.0
    %v2180 = vmax.f32 %v1806, 0.0
    %v2181 = vmax.f32 %v1811, 0.0
    %v2182 = vmax.f32 %v1816, 0.0
    %v2183 = vmax.f32 %v1821, 0.0
    %v2184 = vmax.f32 %v1826, 0.0
    %v2185 = vmax.f32 %v1831, 0.0
    %v2186 = vmax.f32 %v1836, 0.0
    %v2187 = vmax.f32 %v1841, 0.0
    %v2188 = vmax.f32 %v1846, 0.0
    %v2189 = vmax.f32 %v1851, 0.0
    %v2190 = vmax.f32 %v1856, 0.0
    %v2191 = vmax.f32 %v1861, 0.0
    %v2192 = vmax.f32 %v1866, 0.0
    %v2193 = vmax.f32 %v1871, 0.0
    %v2194 = vmax.f32 %v1876, 0.0
    %v2195 = vmax.f32 %v1881, 0.0
    %v2196 = vmax.f32 %v1886, 0.0
    %v2197 = vmax.f32 %v1891, 0.0
    %v2198 = vmax.f32 %v1896, 0.0
    %v2199 = vmax.f32 %v1901, 0.0
    %v2200 = vmax.f32 %v1906, 0.0
    %v2201 = vmax.f32 %v1911, 0.0
    %v2202 = vmax.f32 %v1916, 0.0
    %v2203 = vmax.f32 %v1921, 0.0
    %v2204 = vmax.f32 %v1926, 0.0
    %v2205 = vmax.f32 %v1931, 0.0
    %v2206 = vmax.f32 %v1936, 0.0
    %v2207 = vmax.f32 %v1941, 0.0
    %v2208 = vmax.f32 %v1946, 0.0
    %v2209 = vmax.f32 %v1951, 0.0
    %v2210 = vmax.f32 %v1956, 0.0
    %v2211 = vmax.f32 %v1961, 0.0
    %v2212 = vmax.f32 %v1966, 0.0
    %v2213 = vmax.f32 %v1971, 0.0
    %v2214 = vmax.f32 %v1976, 0.0
    %v2215 = vmax.f32 %v1981, 0.0
    %v2216 = vmax.f32 %v1986, 0.0
    %v2217 = vmax.f32 %v1991, 0.0
    %v2218 = vmax.f32 %v1996, 0.0
    %v2219 = vmax.f32 %v2001, 0.0
    %v2220 = vmax.f32 %v2006, 0.0
    %v2221 = vmax.f32 %v2011, 0.0
    %v2222 = vmax.f32 %v2016, 0.0
    %v2223 = vmax.f32 %v2021, 0.0
    %v2224 = vmax.f32 %v2026, 0.0
    %v2225 = vmax.f32 %v2031, 0.0
    %v2226 = vmax.f32 %v2036, 0.0
    %v2227 = vmax.f32 %v2041, 0.0
    %v2228 = vmax.f32 %v2046, 0.0
    %v2229 = vmax.f32 %v2051, 0.0
    %v2230 = vmax.f32 %v2056, 0.0
    %v2231 = vmax.f32 %v2061, 0.0
    %v2232 = vmax.f32 %v2066, 0.0
    %v2233 = vmax.f32 %v2071, 0.0
    %v2234 = vmax.f32 %v2076, 0.0
    %v2235 = vmax.f32 %v2081, 0.0
    %v2236 = vmax.f32 %v2086, 0.0
    %v2237 = vmax.f32 %v2091, 0.0
    %v2238 = vmax.f32 %v2096, 0.0
    %v2239 = vmax.f32 %v2101, 0.0
    %v2240 = vmax.f32 %v2106, 0.0
    %v2241 = vmax.f32 %v2111, 0.0
    %v2242 = vld [vmem:[%s5] sm:$0xff]
    %2243 = vmatprep.subr.mxu0 0.0
    %2244 = vmatpush1.xpose.msra.mxu0 %v2129
    %2245 = vmatprep.subr.mxu0 0.0
    %2246 = vmatpush1.xpose.msra.mxu0 %v2128
    %2247 = vmatprep.subr.mxu0 0.0
    %2248 = vmatpush1.xpose.msra.mxu0 %v2127
    %2249 = vmatprep.subr.mxu0 0.0
    %2250 = vmatpush1.xpose.msra.mxu0 %v2126
    %2251 = vmatprep.subr.mxu0 0.0
    %2252 = vmatpush1.xpose.msra.mxu0 %v2125
    %2253 = vmatprep.subr.mxu0 0.0
    %2254 = vmatpush1.xpose.msra.mxu0 %v2124
    %2255 = vmatprep.subr.mxu0 0.0
    %2256 = vmatpush1.xpose.msra.mxu0 %v2123
    %2257 = vmatprep.subr.mxu0 0.0
    %2258 = vmatpush1.xpose.msra.mxu0 %v2122
    %2259 = vmatprep.subr.mxu0 0.0
    %2260 = vmatpush1.xpose.msra.mxu0 %v2121
    %2261 = vmatprep.subr.mxu0 0.0
    %2262 = vmatpush1.xpose.msra.mxu0 %v2120
    %2263 = vmatprep.subr.mxu0 0.0
    %2264 = vmatpush1.xpose.msra.mxu0 %v2119
    %2265 = vmatprep.subr.mxu0 0.0
    %2266 = vmatpush1.xpose.msra.mxu0 %v2118
    %2267 = vmatprep.subr.mxu0 0.0
    %2268 = vmatpush1.xpose.msra.mxu0 %v2117
    %2269 = vmatprep.subr.mxu0 0.0
    %2270 = vmatpush1.xpose.msra.mxu0 %v2116
    %2271 = vmatprep.subr.mxu0 0.0
    %2272 = vmatpush1.xpose.msra.mxu0 %v2115
    %2273 = vmatprep.subr.mxu0 0.0
    %2274 = vmatpush1.xpose.msra.mxu0 %v2114
    %2275 = vmatprep.subr.mxu0 0.0
    %2276 = vmatpush2.xpose.msra.mxu0 %v2145
    %2277 = vmatprep.subr.mxu0 0.0
    %2278 = vmatpush2.xpose.msra.mxu0 %v2144
    %2279 = vmatprep.subr.mxu0 0.0
    %2280 = vmatpush2.xpose.msra.mxu0 %v2143
    %2281 = vmatprep.subr.mxu0 0.0
    %2282 = vmatpush2.xpose.msra.mxu0 %v2142
    %2283 = vmatprep.subr.mxu0 0.0
    %2284 = vmatpush2.xpose.msra.mxu0 %v2141
    %2285 = vmatprep.subr.mxu0 0.0
    %2286 = vmatpush2.xpose.msra.mxu0 %v2140
    %2287 = vmatprep.subr.mxu0 0.0
    %2288 = vmatpush2.xpose.msra.mxu0 %v2139
    %2289 = vmatprep.subr.mxu0 0.0
    %2290 = vmatpush2.xpose.msra.mxu0 %v2138
    %2291 = vmatprep.subr.mxu0 0.0
    %2292 = vmatpush2.xpose.msra.mxu0 %v2137
    %2293 = vmatprep.subr.mxu0 0.0
    %2294 = vmatpush2.xpose.msra.mxu0 %v2136
    %2295 = vmatprep.subr.mxu0 0.0
    %2296 = vmatpush2.xpose.msra.mxu0 %v2135
    %2297 = vmatprep.subr.mxu0 0.0
    %2298 = vmatpush2.xpose.msra.mxu0 %v2134
    %2299 = vmatprep.subr.mxu0 0.0
    %2300 = vmatpush2.xpose.msra.mxu0 %v2133
    %2301 = vmatprep.subr.mxu0 0.0
    %2302 = vmatpush2.xpose.msra.mxu0 %v2132
    %2303 = vmatprep.subr.mxu0 0.0
    %2304 = vmatpush2.xpose.msra.mxu0 %v2131
    %2305 = vmatprep.subr.mxu0 0.0
    %2306 = vmatpush2.xpose.msra.mxu0 %v2130
    %2307 = vmatprep.mubr.f32.mxu0 0.0
    %2308 = vmatmul.mubr.f32.gmra.mxu0 %v2242
    %v2309 = vpop.f32.mrf.mxu0
    %v2310 = vadd.f32 0.0, %v2309
    %v2311 = vpop.f32.mrf.mxu0
    %v2312 = vadd.f32 0.0, %v2311
    %2313 = vdwg.mxu0
    %2314 = vmatprep.subr.mxu0 0.0
    %2315 = vmatpush1.xpose.msra.mxu0 %v2161
    %2316 = vmatprep.subr.mxu0 0.0
    %2317 = vmatpush1.xpose.msra.mxu0 %v2160
    %2318 = vmatprep.subr.mxu0 0.0
    %2319 = vmatpush1.xpose.msra.mxu0 %v2159
    %2320 = vmatprep.subr.mxu0 0.0
    %2321 = vmatpush1.xpose.msra.mxu0 %v2158
    %2322 = vmatprep.subr.mxu0 0.0
    %2323 = vmatpush1.xpose.msra.mxu0 %v2157
    %2324 = vmatprep.subr.mxu0 0.0
    %2325 = vmatpush1.xpose.msra.mxu0 %v2156
    %2326 = vmatprep.subr.mxu0 0.0
    %2327 = vmatpush1.xpose.msra.mxu0 %v2155
    %2328 = vmatprep.subr.mxu0 0.0
    %2329 = vmatpush1.xpose.msra.mxu0 %v2154
    %2330 = vmatprep.subr.mxu0 0.0
    %2331 = vmatpush1.xpose.msra.mxu0 %v2153
    %2332 = vmatprep.subr.mxu0 0.0
    %2333 = vmatpush1.xpose.msra.mxu0 %v2152
    %2334 = vmatprep.subr.mxu0 0.0
    %2335 = vmatpush1.xpose.msra.mxu0 %v2151
    %2336 = vmatprep.subr.mxu0 0.0
    %2337 = vmatpush1.xpose.msra.mxu0 %v2150
    %2338 = vmatprep.subr.mxu0 0.0
    %2339 = vmatpush1.xpose.msra.mxu0 %v2149
    %2340 = vmatprep.subr.mxu0 0.0
    %2341 = vmatpush1.xpose.msra.mxu0 %v2148
    %2342 = vmatprep.subr.mxu0 0.0
    %2343 = vmatpush1.xpose.msra.mxu0 %v2147
    %2344 = vmatprep.subr.mxu0 0.0
    %2345 = vmatpush1.xpose.msra.mxu0 %v2146
    %2346 = vmatprep.subr.mxu0 0.0
    %2347 = vmatpush2.xpose.msra.mxu0 %v2177
    %2348 = vmatprep.subr.mxu0 0.0
    %2349 = vmatpush2.xpose.msra.mxu0 %v2176
    %2350 = vmatprep.subr.mxu0 0.0
    %2351 = vmatpush2.xpose.msra.mxu0 %v2175
    %2352 = vmatprep.subr.mxu0 0.0
    %2353 = vmatpush2.xpose.msra.mxu0 %v2174
    %2354 = vmatprep.subr.mxu0 0.0
    %2355 = vmatpush2.xpose.msra.mxu0 %v2173
    %2356 = vmatprep.subr.mxu0 0.0
    %2357 = vmatpush2.xpose.msra.mxu0 %v2172
    %2358 = vmatprep.subr.mxu0 0.0
    %2359 = vmatpush2.xpose.msra.mxu0 %v2171
    %2360 = vmatprep.subr.mxu0 0.0
    %2361 = vmatpush2.xpose.msra.mxu0 %v2170
    %2362 = vmatprep.subr.mxu0 0.0
    %2363 = vmatpush2.xpose.msra.mxu0 %v2169
    %2364 = vmatprep.subr.mxu0 0.0
    %2365 = vmatpush2.xpose.msra.mxu0 %v2168
    %2366 = vmatprep.subr.mxu0 0.0
    %2367 = vmatpush2.xpose.msra.mxu0 %v2167
    %2368 = vmatprep.subr.mxu0 0.0
    %2369 = vmatpush2.xpose.msra.mxu0 %v2166
    %2370 = vmatprep.subr.mxu0 0.0
    %2371 = vmatpush2.xpose.msra.mxu0 %v2165
    %2372 = vmatprep.subr.mxu0 0.0
    %2373 = vmatpush2.xpose.msra.mxu0 %v2164
    %2374 = vmatprep.subr.mxu0 0.0
    %2375 = vmatpush2.xpose.msra.mxu0 %v2163
    %2376 = vmatprep.subr.mxu0 0.0
    %2377 = vmatpush2.xpose.msra.mxu0 %v2162
    %2378 = vmatprep.mubr.f32.mxu0 0.0
    %2379 = vmatmul.mubr.f32.gmra.mxu0 %v2242
    %v2380 = vpop.f32.mrf.mxu0
    %v2381 = vadd.f32 0.0, %v2380
    %v2382 = vpop.f32.mrf.mxu0
    %v2383 = vadd.f32 0.0, %v2382
    %2384 = vdwg.mxu0
    %2385 = vmatprep.subr.mxu0 0.0
    %2386 = vmatpush1.xpose.msra.mxu0 %v2193
    %2387 = vmatprep.subr.mxu0 0.0
    %2388 = vmatpush1.xpose.msra.mxu0 %v2192
    %2389 = vmatprep.subr.mxu0 0.0
    %2390 = vmatpush1.xpose.msra.mxu0 %v2191
    %2391 = vmatprep.subr.mxu0 0.0
    %2392 = vmatpush1.xpose.msra.mxu0 %v2190
    %2393 = vmatprep.subr.mxu0 0.0
    %2394 = vmatpush1.xpose.msra.mxu0 %v2189
    %2395 = vmatprep.subr.mxu0 0.0
    %2396 = vmatpush1.xpose.msra.mxu0 %v2188
    %2397 = vmatprep.subr.mxu0 0.0
    %2398 = vmatpush1.xpose.msra.mxu0 %v2187
    %2399 = vmatprep.subr.mxu0 0.0
    %2400 = vmatpush1.xpose.msra.mxu0 %v2186
    %2401 = vmatprep.subr.mxu0 0.0
    %2402 = vmatpush1.xpose.msra.mxu0 %v2185
    %2403 = vmatprep.subr.mxu0 0.0
    %2404 = vmatpush1.xpose.msra.mxu0 %v2184
    %2405 = vmatprep.subr.mxu0 0.0
    %2406 = vmatpush1.xpose.msra.mxu0 %v2183
    %2407 = vmatprep.subr.mxu0 0.0
    %2408 = vmatpush1.xpose.msra.mxu0 %v2182
    %2409 = vmatprep.subr.mxu0 0.0
    %2410 = vmatpush1.xpose.msra.mxu0 %v2181
    %2411 = vmatprep.subr.mxu0 0.0
    %2412 = vmatpush1.xpose.msra.mxu0 %v2180
    %2413 = vmatprep.subr.mxu0 0.0
    %2414 = vmatpush1.xpose.msra.mxu0 %v2179
    %2415 = vmatprep.subr.mxu0 0.0
    %2416 = vmatpush1.xpose.msra.mxu0 %v2178
    %2417 = vmatprep.subr.mxu0 0.0
    %2418 = vmatpush2.xpose.msra.mxu0 %v2209
    %2419 = vmatprep.subr.mxu0 0.0
    %2420 = vmatpush2.xpose.msra.mxu0 %v2208
    %2421 = vmatprep.subr.mxu0 0.0
    %2422 = vmatpush2.xpose.msra.mxu0 %v2207
    %2423 = vmatprep.subr.mxu0 0.0
    %2424 = vmatpush2.xpose.msra.mxu0 %v2206
    %2425 = vmatprep.subr.mxu0 0.0
    %2426 = vmatpush2.xpose.msra.mxu0 %v2205
    %2427 = vmatprep.subr.mxu0 0.0
    %2428 = vmatpush2.xpose.msra.mxu0 %v2204
    %2429 = vmatprep.subr.mxu0 0.0
    %2430 = vmatpush2.xpose.msra.mxu0 %v2203
    %2431 = vmatprep.subr.mxu0 0.0
    %2432 = vmatpush2.xpose.msra.mxu0 %v2202
    %2433 = vmatprep.subr.mxu0 0.0
    %2434 = vmatpush2.xpose.msra.mxu0 %v2201
    %2435 = vmatprep.subr.mxu0 0.0
    %2436 = vmatpush2.xpose.msra.mxu0 %v2200
    %2437 = vmatprep.subr.mxu0 0.0
    %2438 = vmatpush2.xpose.msra.mxu0 %v2199
    %2439 = vmatprep.subr.mxu0 0.0
    %2440 = vmatpush2.xpose.msra.mxu0 %v2198
    %2441 = vmatprep.subr.mxu0 0.0
    %2442 = vmatpush2.xpose.msra.mxu0 %v2197
    %2443 = vmatprep.subr.mxu0 0.0
    %2444 = vmatpush2.xpose.msra.mxu0 %v2196
    %2445 = vmatprep.subr.mxu0 0.0
    %2446 = vmatpush2.xpose.msra.mxu0 %v2195
    %2447 = vmatprep.subr.mxu0 0.0
    %2448 = vmatpush2.xpose.msra.mxu0 %v2194
    %2449 = vmatprep.mubr.f32.mxu0 0.0
    %2450 = vmatmul.mubr.f32.gmra.mxu0 %v2242
    %v2451 = vpop.f32.mrf.mxu0
    %v2452 = vadd.f32 0.0, %v2451
    %v2453 = vpop.f32.mrf.mxu0
    %v2454 = vadd.f32 0.0, %v2453
    %2455 = vdwg.mxu0
    %2456 = vmatprep.subr.mxu0 0.0
    %2457 = vmatpush1.xpose.msra.mxu0 %v2225
    %2458 = vmatprep.subr.mxu0 0.0
    %2459 = vmatpush1.xpose.msra.mxu0 %v2224
    %2460 = vmatprep.subr.mxu0 0.0
    %2461 = vmatpush1.xpose.msra.mxu0 %v2223
    %2462 = vmatprep.subr.mxu0 0.0
    %2463 = vmatpush1.xpose.msra.mxu0 %v2222
    %2464 = vmatprep.subr.mxu0 0.0
    %2465 = vmatpush1.xpose.msra.mxu0 %v2221
    %2466 = vmatprep.subr.mxu0 0.0
    %2467 = vmatpush1.xpose.msra.mxu0 %v2220
    %2468 = vmatprep.subr.mxu0 0.0
    %2469 = vmatpush1.xpose.msra.mxu0 %v2219
    %2470 = vmatprep.subr.mxu0 0.0
    %2471 = vmatpush1.xpose.msra.mxu0 %v2218
    %2472 = vmatprep.subr.mxu0 0.0
    %2473 = vmatpush1.xpose.msra.mxu0 %v2217
    %2474 = vmatprep.subr.mxu0 0.0
    %2475 = vmatpush1.xpose.msra.mxu0 %v2216
    %2476 = vmatprep.subr.mxu0 0.0
    %2477 = vmatpush1.xpose.msra.mxu0 %v2215
    %2478 = vmatprep.subr.mxu0 0.0
    %2479 = vmatpush1.xpose.msra.mxu0 %v2214
    %2480 = vmatprep.subr.mxu0 0.0
    %2481 = vmatpush1.xpose.msra.mxu0 %v2213
    %2482 = vmatprep.subr.mxu0 0.0
    %2483 = vmatpush1.xpose.msra.mxu0 %v2212
    %2484 = vmatprep.subr.mxu0 0.0
    %2485 = vmatpush1.xpose.msra.mxu0 %v2211
    %2486 = vmatprep.subr.mxu0 0.0
    %2487 = vmatpush1.xpose.msra.mxu0 %v2210
    %2488 = vmatprep.subr.mxu0 0.0
    %2489 = vmatpush2.xpose.msra.mxu0 %v2241
    %2490 = vmatprep.subr.mxu0 0.0
    %2491 = vmatpush2.xpose.msra.mxu0 %v2240
    %2492 = vmatprep.subr.mxu0 0.0
    %2493 = vmatpush2.xpose.msra.mxu0 %v2239
    %2494 = vmatprep.subr.mxu0 0.0
    %2495 = vmatpush2.xpose.msra.mxu0 %v2238
    %2496 = vmatprep.subr.mxu0 0.0
    %2497 = vmatpush2.xpose.msra.mxu0 %v2237
    %2498 = vmatprep.subr.mxu0 0.0
    %2499 = vmatpush2.xpose.msra.mxu0 %v2236
    %2500 = vmatprep.subr.mxu0 0.0
    %2501 = vmatpush2.xpose.msra.mxu0 %v2235
    %2502 = vmatprep.subr.mxu0 0.0
    %2503 = vmatpush2.xpose.msra.mxu0 %v2234
    %2504 = vmatprep.subr.mxu0 0.0
    %2505 = vmatpush2.xpose.msra.mxu0 %v2233
    %2506 = vmatprep.subr.mxu0 0.0
    %2507 = vmatpush2.xpose.msra.mxu0 %v2232
    %2508 = vmatprep.subr.mxu0 0.0
    %2509 = vmatpush2.xpose.msra.mxu0 %v2231
    %2510 = vmatprep.subr.mxu0 0.0
    %2511 = vmatpush2.xpose.msra.mxu0 %v2230
    %2512 = vmatprep.subr.mxu0 0.0
    %2513 = vmatpush2.xpose.msra.mxu0 %v2229
    %2514 = vmatprep.subr.mxu0 0.0
    %2515 = vmatpush2.xpose.msra.mxu0 %v2228
    %2516 = vmatprep.subr.mxu0 0.0
    %2517 = vmatpush2.xpose.msra.mxu0 %v2227
    %2518 = vmatprep.subr.mxu0 0.0
    %2519 = vmatpush2.xpose.msra.mxu0 %v2226
    %2520 = vmatprep.mubr.f32.mxu0 0.0
    %2521 = vmatmul.mubr.f32.gmra.mxu0 %v2242
    %v2522 = vpop.f32.mrf.mxu0
    %v2523 = vadd.f32 0.0, %v2522
    %v2524 = vpop.f32.mrf.mxu0
    %v2525 = vadd.f32 0.0, %v2524
    %2526 = vdwg.mxu0
    %v2527 = vld [vmem:[#allocation2] sm:$0x1]
    %2529 = vset.pattern.permute.xlu0 0
    %2530 = vperm.xlu0 %2529, %v2527
    %v2531 = vpop.permute.xlu0 %2530
    %v2533 = vlaneseq
    %v2534 = vshrl.u32 %v2533, 7
    %v2535 = vsub.s32 0, %v2534
    %v2536 = vrot.slane %v2531, %v2535
    %v2537 = vadd.f32 %v2310, %v2536
    %v2538 = vadd.f32 %v2312, %v2536
    %v2539 = vadd.f32 %v2381, %v2536
    %v2540 = vadd.f32 %v2383, %v2536
    %v2541 = vadd.f32 %v2452, %v2536
    %v2542 = vadd.f32 %v2454, %v2536
    %v2543 = vadd.f32 %v2523, %v2536
    %v2544 = vadd.f32 %v2525, %v2536
    %v2553 = vcombine.low %v2537, %v2538
    %v2554 = vcombine.low %v2539, %v2540
    %v2555 = vcombine.low %v2541, %v2542
    %v2556 = vcombine.low %v2543, %v2544
    %v2558 = vunpack.c.l.s4 1966171168
    %v2559 = vunpack.c.0.s8 %v2558
    %v2560 = vlaneseq
    %v2561 = vshrl.u32 %v2560, 7
    %v2562 = vsub.s32 %v2559, %v2561
    %v2563 = vrot.slane %v2553, %v2562
    %v2565 = vunpack.c.l.s4 1966171168
    %v2566 = vunpack.c.0.s8 %v2565
    %v2567 = vlaneseq
    %v2568 = vshrl.u32 %v2567, 7
    %v2569 = vsub.s32 %v2566, %v2568
    %v2570 = vrot.slane %v2554, %v2569
    %v2572 = vunpack.c.l.s4 1966171168
    %v2573 = vunpack.c.0.s8 %v2572
    %v2574 = vlaneseq
    %v2575 = vshrl.u32 %v2574, 7
    %v2576 = vsub.s32 %v2573, %v2575
    %v2577 = vrot.slane %v2555, %v2576
    %v2579 = vunpack.c.l.s4 1966171168
    %v2580 = vunpack.c.0.s8 %v2579
    %v2581 = vlaneseq
    %v2582 = vshrl.u32 %v2581, 7
    %v2583 = vsub.s32 %v2580, %v2582
    %v2584 = vrot.slane %v2556, %v2583
    %v2585 = vcombine.low %v2563, %v2570
    %v2586 = vcombine.low %v2577, %v2584
    %v2588 = vunpack.c.l.s4 1966171168
    %v2589 = vunpack.c.0.s8 %v2588
    %v2590 = vlaneseq
    %v2591 = vshrl.u32 %v2590, 7
    %v2592 = vsub.s32 %v2589, %v2591
    %v2593 = vrot.slane %v2585, %v2592
    %v2595 = vunpack.c.l.s4 1966171168
    %v2596 = vunpack.c.0.s8 %v2595
    %v2597 = vlaneseq
    %v2598 = vshrl.u32 %v2597, 7
    %v2599 = vsub.s32 %v2596, %v2598
    %v2600 = vrot.slane %v2586, %v2599
    %v2601 = vcombine.low %v2593, %v2600
    %2603 = vst [vmem:[#allocation3] sm:$0xff] %v2601
    // Predicated region
    $region30: #{tpu_custom_call.1} parent=1 // pred_check
      _
    $region31: #{tpu_custom_call.1} parent=1 // pred_check_branch
      %2605 = sbr.rel (0) target = $region33
    $region32: #{tpu_custom_call.1} parent=1 // pred_region
      %s2607 = ssub.s32 128, 128
      %2608 = vsyncadd [#allocation4], %s2607
      %s2610 = sshll.u32 [#allocation3], 4
      %s2611 = int_to_ptr.vmem [resolvable:$true] %s2610
      %2613 = dma.vmem_to_hbm [thread:$0]  %s2611, 128, %s7, [#allocation4]
    $region33: #{tpu_custom_call.1} parent=1 // pred_fallthru
      _
    // Predicated region
    $region34: #{tpu_custom_call.1} parent=1 // pred_check
      _
    $region35: #{tpu_custom_call.1} parent=1 // pred_check_branch
      %2615 = sbr.rel (0) target = $region37
    $region36: #{tpu_custom_call.1} parent=1 // pred_region
      %2616 = dma.done [#allocation4], 128
    $region37: #{tpu_custom_call.1} parent=1 // pred_fallthru
      _
    %2617 = vsyncpa [#allocation4], 1

</llo_original>
